<compile_context>
chip_gen: v5e
topology: v5e:2x2
jax: 0.10.0
libtpu: 0.0.40
codegen_flags: <defaults>
</compile_context>

<pallas_src>
import jax
import jax.numpy as jnp
from jax.experimental import pallas as pl
from jax.experimental.pallas import tpu as pltpu


def make_rnn_kernel(num_layers, hidden, seq):
    """Builds the fused LSTM + MLP-head + softmax kernel."""
    H = hidden

    def kernel(*refs):
        # refs = [x, (wih, whh, b) * num_layers, w1, b1, w2, b2, out]
        x_ref = refs[0]
        pos = 1
        layers = []
        for _ in range(num_layers):
            layers.append(tuple(refs[pos:pos + 3]))
            pos += 3
        w1_ref, b1_ref, w2_ref, b2_ref = refs[pos:pos + 4]
        out_ref = refs[pos + 4]

        # ---- hoisted, non-recurrent layer-0 input projection for all timesteps ----
        wih0_ref, whh0_ref, b0_ref = layers[0]
        xproj = jnp.dot(x_ref[...], wih0_ref[...],
                        preferred_element_type=jnp.float32) + b0_ref[...]   # (seq, 4H)
        whh0 = whh0_ref[...]

        # Preload weights of the upper layers once (hoisted out of the loop).
        upper = []
        for l in range(1, num_layers):
            wih_ref, whh_ref, b_ref = layers[l]
            upper.append((wih_ref[...], whh_ref[...], b_ref[...]))

        def apply_gates(pre, c_prev):
            # pre: (1, 4H) lane-dense gate pre-activations in PyTorch order [i, f, g, o]
            s = jax.nn.sigmoid(pre)          # one EUP pass over the full vreg
            t = jnp.tanh(pre)                # one EUP pass over the full vreg
            i_g = s[:, 0:H]
            f_g = s[:, H:2 * H]
            g_g = t[:, 2 * H:3 * H]
            o_g = s[:, 3 * H:4 * H]
            c_new = f_g * c_prev + i_g * g_g
            h_new = o_g * jnp.tanh(c_new)
            return h_new, c_new

        # h0 / c0 are zeros (matches _init_hidden); pure dataflow, no scratch refs.
        h = [jnp.zeros((1, H), jnp.float32) for _ in range(num_layers)]
        c = [jnp.zeros((1, H), jnp.float32) for _ in range(num_layers)]

        top_h = []
        for t in range(seq):                                 # fully unrolled, seq is small
            # ---- layer 0: precomputed input term + recurrent matmul ----
            pre0 = xproj[t:t + 1, :] + jnp.dot(h[0], whh0,
                                               preferred_element_type=jnp.float32)
            h[0], c[0] = apply_gates(pre0, c[0])
            inp = h[0]
            # ---- stacked upper LSTM layers ----
            for l in range(1, num_layers):
                wih_v, whh_v, b_v = upper[l - 1]
                pre = (jnp.dot(inp, wih_v, preferred_element_type=jnp.float32)
                       + jnp.dot(h[l], whh_v, preferred_element_type=jnp.float32)
                       + b_v)
                h[l], c[l] = apply_gates(pre, c[l])
                inp = h[l]
            top_h.append(inp)

        # ---- hoisted head: lin1 -> tanh -> lin2 -> softmax(dim=1), batched over seq ----
        hs = jnp.concatenate(top_h, axis=0)                  # (seq, H)
        z1 = jnp.tanh(jnp.dot(hs, w1_ref[...],
                              preferred_element_type=jnp.float32) + b1_ref[...])
        z2 = jnp.dot(z1, w2_ref[...],
                     preferred_element_type=jnp.float32) + b2_ref[...]       # (seq, 2)
        z2 = z2 - jnp.max(z2, axis=1, keepdims=True)
        e = jnp.exp(z2)
        out_ref[...] = e / jnp.sum(e, axis=1, keepdims=True)  # single store

    return kernel


def rnn_forward(x, params):
    """x: [seq_len, batch=1, input_size] -> softmax probs [seq_len, 2]."""
    seq, batch, _ = x.shape
    assert batch == 1, "module's view(seq, -1) + Linear(hidden, 26) implies batch==1"
    x2d = x[:, 0, :]                                         # (seq, input_size)

    num_layers = len(params["lstm"])
    hidden = params["lstm"][0]["whh"].shape[0]

    inputs = [x2d]
    for layer in params["lstm"]:
        inputs += [layer["wih"], layer["whh"], layer["b"]]
    inputs += [params["w1"], params["b1"], params["w2"], params["b2"]]

    kernel = make_rnn_kernel(num_layers, hidden, seq)
    return pl.pallas_call(
        kernel,
        out_shape=jax.ShapeDtypeStruct((seq, 2), jnp.float32),
        in_specs=[pl.BlockSpec(memory_space=pltpu.MemorySpace.VMEM)] * len(inputs),
        out_specs=pl.BlockSpec(memory_space=pltpu.MemorySpace.VMEM),
    )(*inputs)


def init_params(key, input_size, hidden, num_layers):
    """Deterministic params, PyTorch init convention, converted to kernel layout."""
    def u(k, shape, bound):
        return jax.random.uniform(k, shape, jnp.float32, -bound, bound)

    params = {"lstm": []}
    bound = 1.0 / float(hidden) ** 0.5
    for l in range(num_layers):
        in_l = input_size if l == 0 else hidden
        key, k1, k2, k3, k4 = jax.random.split(key, 5)
        w_ih = u(k1, (4 * hidden, in_l), bound)              # PyTorch weight_ih_l{l}
        w_hh = u(k2, (4 * hidden, hidden), bound)            # PyTorch weight_hh_l{l}
        b_ih = u(k3, (4 * hidden,), bound)
        b_hh = u(k4, (4 * hidden,), bound)
        params["lstm"].append({
            # gates packed along lanes, transposed for x @ W form
            "wih": w_ih.T,                                   # (in, 4H), cols [i|f|g|o]
            "whh": w_hh.T,                                   # (H, 4H)
            "b": (b_ih + b_hh).reshape(1, 4 * hidden),       # (1, 4H)
        })

    key, k1, k2, k3, k4 = jax.random.split(key, 5)
    b1 = 1.0 / float(hidden) ** 0.5
    b2 = 1.0 / float(26) ** 0.5
    params["w1"] = u(k1, (26, hidden), b1).T                 # (H, 26)
    params["b1"] = u(k2, (26,), b1).reshape(1, 26)
    params["w2"] = u(k3, (2, 26), b2).T                      # (26, 2)
    params["b2"] = u(k4, (2,), b2).reshape(1, 2)
    return params


def rnn_forward_ref(x, params):
    """Pure-JAX reference (same math as the PyTorch module, batch=1)."""
    seq = x.shape[0]
    num_layers = len(params["lstm"])
    H = params["lstm"][0]["whh"].shape[0]
    h = [jnp.zeros((H,), jnp.float32) for _ in range(num_layers)]
    c = [jnp.zeros((H,), jnp.float32) for _ in range(num_layers)]
    outs = []
    for t in range(seq):
        inp = x[t, 0]
        for l, layer in enumerate(params["lstm"]):
            pre = inp @ layer["wih"] + h[l] @ layer["whh"] + layer["b"][0]
            i_g = jax.nn.sigmoid(pre[0:H])
            f_g = jax.nn.sigmoid(pre[H:2 * H])
            g_g = jnp.tanh(pre[2 * H:3 * H])
            o_g = jax.nn.sigmoid(pre[3 * H:4 * H])
            c[l] = f_g * c[l] + i_g * g_g
            h[l] = o_g * jnp.tanh(c[l])
            inp = h[l]
        z1 = jnp.tanh(inp @ params["w1"] + params["b1"][0])
        z2 = z1 @ params["w2"] + params["b2"][0]
        outs.append(jax.nn.softmax(z2))
    return jnp.stack(outs)


if __name__ == "__main__":
    SEQ, BATCH, INPUT_SIZE, HIDDEN, NUM_LAYERS = 8, 1, 16, 32, 2

    key = jax.random.PRNGKey(0)
    kx, kp = jax.random.split(key)
    x = jax.random.normal(kx, (SEQ, BATCH, INPUT_SIZE), jnp.float32)
    params = init_params(kp, INPUT_SIZE, HIDDEN, NUM_LAYERS)

    out = rnn_forward(x, params)
    out = jax.block_until_ready(out)

    assert out.shape == (SEQ, 2) and out.dtype == jnp.float32
    ref = rnn_forward_ref(x, params)
    if not jnp.allclose(out, ref, atol=2e-4, rtol=2e-4):
        raise AssertionError(f"mismatch vs reference: max abs err "
                             f"{float(jnp.max(jnp.abs(out - ref)))}")
    print("KERNEL_OK")
</pallas_src>

<mosaic_0001>
module attributes {stable_mosaic.version = 11 : i64} {
  func.func @kernel(%arg0: memref<8x16xf32, #tpu.memory_space<vmem>>, %arg1: memref<16x128xf32, #tpu.memory_space<vmem>>, %arg2: memref<32x128xf32, #tpu.memory_space<vmem>>, %arg3: memref<1x128xf32, #tpu.memory_space<vmem>>, %arg4: memref<32x128xf32, #tpu.memory_space<vmem>>, %arg5: memref<32x128xf32, #tpu.memory_space<vmem>>, %arg6: memref<1x128xf32, #tpu.memory_space<vmem>>, %arg7: memref<32x26xf32, #tpu.memory_space<vmem>>, %arg8: memref<1x26xf32, #tpu.memory_space<vmem>>, %arg9: memref<26x2xf32, #tpu.memory_space<vmem>>, %arg10: memref<1x2xf32, #tpu.memory_space<vmem>>, %arg11: memref<8x2xf32, #tpu.memory_space<vmem>>) attributes {dimension_semantics = [], scalar_prefetch = 0 : i64, scratch_operands = 0 : i64, tpu.core_type = #tpu.core_type<tc>} {
    %c0 = arith.constant 0 : index
    %c0_0 = arith.constant 0 : index
    %0 = vector.load %arg0[%c0, %c0_0] : memref<8x16xf32, #tpu.memory_space<vmem>>, vector<8x16xf32>
    %c0_1 = arith.constant 0 : index
    %c0_2 = arith.constant 0 : index
    %1 = vector.load %arg1[%c0_1, %c0_2] : memref<16x128xf32, #tpu.memory_space<vmem>>, vector<16x128xf32>
    %cst = arith.constant dense<0.000000e+00> : vector<8x128xf32>
    %2 = tpu.matmul %0, %1, %cst {dimension_numbers = #tpu.dot_dimension_numbers<[1], [0], [0], [1], [0, 0, 1, 1], [], []>} : vector<8x16xf32>, vector<16x128xf32>, vector<8x128xf32> -> vector<8x128xf32>
    %c0_3 = arith.constant 0 : index
    %c0_4 = arith.constant 0 : index
    %3 = vector.load %arg3[%c0_3, %c0_4] : memref<1x128xf32, #tpu.memory_space<vmem>>, vector<1x128xf32>
    %4 = vector.broadcast %3 : vector<1x128xf32> to vector<8x128xf32>
    %5 = arith.addf %2, %4 : vector<8x128xf32>
    %c0_5 = arith.constant 0 : index
    %c0_6 = arith.constant 0 : index
    %6 = vector.load %arg2[%c0_5, %c0_6] : memref<32x128xf32, #tpu.memory_space<vmem>>, vector<32x128xf32>
    %c0_7 = arith.constant 0 : index
    %c0_8 = arith.constant 0 : index
    %7 = vector.load %arg4[%c0_7, %c0_8] : memref<32x128xf32, #tpu.memory_space<vmem>>, vector<32x128xf32>
    %c0_9 = arith.constant 0 : index
    %c0_10 = arith.constant 0 : index
    %8 = vector.load %arg5[%c0_9, %c0_10] : memref<32x128xf32, #tpu.memory_space<vmem>>, vector<32x128xf32>
    %c0_11 = arith.constant 0 : index
    %c0_12 = arith.constant 0 : index
    %9 = vector.load %arg6[%c0_11, %c0_12] : memref<1x128xf32, #tpu.memory_space<vmem>>, vector<1x128xf32>
    %cst_13 = arith.constant 0.000000e+00 : f32
    %10 = vector.broadcast %cst_13 : f32 to vector<1x32xf32>
    %cst_14 = arith.constant 0.000000e+00 : f32
    %11 = vector.broadcast %cst_14 : f32 to vector<1x32xf32>
    %cst_15 = arith.constant 0.000000e+00 : f32
    %12 = vector.broadcast %cst_15 : f32 to vector<1x32xf32>
    %cst_16 = arith.constant 0.000000e+00 : f32
    %13 = vector.broadcast %cst_16 : f32 to vector<1x32xf32>
    %14 = vector.extract_strided_slice %5 {offsets = [0, 0], sizes = [1, 128], strides = [1, 1]} : vector<8x128xf32> to vector<1x128xf32>
    %cst_17 = arith.constant dense<0.000000e+00> : vector<1x128xf32>
    %15 = tpu.matmul %10, %6, %cst_17 {dimension_numbers = #tpu.dot_dimension_numbers<[1], [0], [0], [1], [0, 0, 1, 1], [], []>} : vector<1x32xf32>, vector<32x128xf32>, vector<1x128xf32> -> vector<1x128xf32>
    %16 = arith.addf %14, %15 : vector<1x128xf32>
    %17 = arith.negf %16 : vector<1x128xf32>
    %18 = math.exp %17 : vector<1x128xf32>
    %cst_18 = arith.constant 1.000000e+00 : f32
    %19 = vector.broadcast %cst_18 : f32 to vector<1x128xf32>
    %20 = arith.addf %19, %18 : vector<1x128xf32>
    %21 = arith.divf %19, %20 : vector<1x128xf32>
    %22 = math.tanh %16 : vector<1x128xf32>
    %23 = vector.extract_strided_slice %21 {offsets = [0, 0], sizes = [1, 32], strides = [1, 1]} : vector<1x128xf32> to vector<1x32xf32>
    %24 = vector.extract_strided_slice %21 {offsets = [0, 32], sizes = [1, 32], strides = [1, 1]} : vector<1x128xf32> to vector<1x32xf32>
    %25 = vector.extract_strided_slice %22 {offsets = [0, 64], sizes = [1, 32], strides = [1, 1]} : vector<1x128xf32> to vector<1x32xf32>
    %26 = vector.extract_strided_slice %21 {offsets = [0, 96], sizes = [1, 32], strides = [1, 1]} : vector<1x128xf32> to vector<1x32xf32>
    %27 = arith.mulf %24, %12 : vector<1x32xf32>
    %28 = arith.mulf %23, %25 : vector<1x32xf32>
    %29 = arith.addf %27, %28 : vector<1x32xf32>
    %30 = math.tanh %29 : vector<1x32xf32>
    %31 = arith.mulf %26, %30 : vector<1x32xf32>
    %cst_19 = arith.constant dense<0.000000e+00> : vector<1x128xf32>
    %32 = tpu.matmul %31, %7, %cst_19 {dimension_numbers = #tpu.dot_dimension_numbers<[1], [0], [0], [1], [0, 0, 1, 1], [], []>} : vector<1x32xf32>, vector<32x128xf32>, vector<1x128xf32> -> vector<1x128xf32>
    %cst_20 = arith.constant dense<0.000000e+00> : vector<1x128xf32>
    %33 = tpu.matmul %11, %8, %cst_20 {dimension_numbers = #tpu.dot_dimension_numbers<[1], [0], [0], [1], [0, 0, 1, 1], [], []>} : vector<1x32xf32>, vector<32x128xf32>, vector<1x128xf32> -> vector<1x128xf32>
    %34 = arith.addf %32, %33 : vector<1x128xf32>
    %35 = arith.addf %34, %9 : vector<1x128xf32>
    %36 = arith.negf %35 : vector<1x128xf32>
    %37 = math.exp %36 : vector<1x128xf32>
    %cst_21 = arith.constant 1.000000e+00 : f32
    %38 = vector.broadcast %cst_21 : f32 to vector<1x128xf32>
    %39 = arith.addf %38, %37 : vector<1x128xf32>
    %40 = arith.divf %38, %39 : vector<1x128xf32>
    %41 = math.tanh %35 : vector<1x128xf32>
    %42 = vector.extract_strided_slice %40 {offsets = [0, 0], sizes = [1, 32], strides = [1, 1]} : vector<1x128xf32> to vector<1x32xf32>
    %43 = vector.extract_strided_slice %40 {offsets = [0, 32], sizes = [1, 32], strides = [1, 1]} : vector<1x128xf32> to vector<1x32xf32>
    %44 = vector.extract_strided_slice %41 {offsets = [0, 64], sizes = [1, 32], strides = [1, 1]} : vector<1x128xf32> to vector<1x32xf32>
    %45 = vector.extract_strided_slice %40 {offsets = [0, 96], sizes = [1, 32], strides = [1, 1]} : vector<1x128xf32> to vector<1x32xf32>
    %46 = arith.mulf %43, %13 : vector<1x32xf32>
    %47 = arith.mulf %42, %44 : vector<1x32xf32>
    %48 = arith.addf %46, %47 : vector<1x32xf32>
    %49 = math.tanh %48 : vector<1x32xf32>
    %50 = arith.mulf %45, %49 : vector<1x32xf32>
    %51 = vector.extract_strided_slice %5 {offsets = [1, 0], sizes = [1, 128], strides = [1, 1]} : vector<8x128xf32> to vector<1x128xf32>
    %cst_22 = arith.constant dense<0.000000e+00> : vector<1x128xf32>
    %52 = tpu.matmul %31, %6, %cst_22 {dimension_numbers = #tpu.dot_dimension_numbers<[1], [0], [0], [1], [0, 0, 1, 1], [], []>} : vector<1x32xf32>, vector<32x128xf32>, vector<1x128xf32> -> vector<1x128xf32>
    %53 = arith.addf %51, %52 : vector<1x128xf32>
    %54 = arith.negf %53 : vector<1x128xf32>
    %55 = math.exp %54 : vector<1x128xf32>
    %cst_23 = arith.constant 1.000000e+00 : f32
    %56 = vector.broadcast %cst_23 : f32 to vector<1x128xf32>
    %57 = arith.addf %56, %55 : vector<1x128xf32>
    %58 = arith.divf %56, %57 : vector<1x128xf32>
    %59 = math.tanh %53 : vector<1x128xf32>
    %60 = vector.extract_strided_slice %58 {offsets = [0, 0], sizes = [1, 32], strides = [1, 1]} : vector<1x128xf32> to vector<1x32xf32>
    %61 = vector.extract_strided_slice %58 {offsets = [0, 32], sizes = [1, 32], strides = [1, 1]} : vector<1x128xf32> to vector<1x32xf32>
    %62 = vector.extract_strided_slice %59 {offsets = [0, 64], sizes = [1, 32], strides = [1, 1]} : vector<1x128xf32> to vector<1x32xf32>
    %63 = vector.extract_strided_slice %58 {offsets = [0, 96], sizes = [1, 32], strides = [1, 1]} : vector<1x128xf32> to vector<1x32xf32>
    %64 = arith.mulf %61, %29 : vector<1x32xf32>
    %65 = arith.mulf %60, %62 : vector<1x32xf32>
    %66 = arith.addf %64, %65 : vector<1x32xf32>
    %67 = math.tanh %66 : vector<1x32xf32>
    %68 = arith.mulf %63, %67 : vector<1x32xf32>
    %cst_24 = arith.constant dense<0.000000e+00> : vector<1x128xf32>
    %69 = tpu.matmul %68, %7, %cst_24 {dimension_numbers = #tpu.dot_dimension_numbers<[1], [0], [0], [1], [0, 0, 1, 1], [], []>} : vector<1x32xf32>, vector<32x128xf32>, vector<1x128xf32> -> vector<1x128xf32>
    %cst_25 = arith.constant dense<0.000000e+00> : vector<1x128xf32>
    %70 = tpu.matmul %50, %8, %cst_25 {dimension_numbers = #tpu.dot_dimension_numbers<[1], [0], [0], [1], [0, 0, 1, 1], [], []>} : vector<1x32xf32>, vector<32x128xf32>, vector<1x128xf32> -> vector<1x128xf32>
    %71 = arith.addf %69, %70 : vector<1x128xf32>
    %72 = arith.addf %71, %9 : vector<1x128xf32>
    %73 = arith.negf %72 : vector<1x128xf32>
    %74 = math.exp %73 : vector<1x128xf32>
    %cst_26 = arith.constant 1.000000e+00 : f32
    %75 = vector.broadcast %cst_26 : f32 to vector<1x128xf32>
    %76 = arith.addf %75, %74 : vector<1x128xf32>
    %77 = arith.divf %75, %76 : vector<1x128xf32>
    %78 = math.tanh %72 : vector<1x128xf32>
    %79 = vector.extract_strided_slice %77 {offsets = [0, 0], sizes = [1, 32], strides = [1, 1]} : vector<1x128xf32> to vector<1x32xf32>
    %80 = vector.extract_strided_slice %77 {offsets = [0, 32], sizes = [1, 32], strides = [1, 1]} : vector<1x128xf32> to vector<1x32xf32>
    %81 = vector.extract_strided_slice %78 {offsets = [0, 64], sizes = [1, 32], strides = [1, 1]} : vector<1x128xf32> to vector<1x32xf32>
    %82 = vector.extract_strided_slice %77 {offsets = [0, 96], sizes = [1, 32], strides = [1, 1]} : vector<1x128xf32> to vector<1x32xf32>
    %83 = arith.mulf %80, %48 : vector<1x32xf32>
    %84 = arith.mulf %79, %81 : vector<1x32xf32>
    %85 = arith.addf %83, %84 : vector<1x32xf32>
    %86 = math.tanh %85 : vector<1x32xf32>
    %87 = arith.mulf %82, %86 : vector<1x32xf32>
    %88 = vector.extract_strided_slice %5 {offsets = [2, 0], sizes = [1, 128], strides = [1, 1]} : vector<8x128xf32> to vector<1x128xf32>
    %cst_27 = arith.constant dense<0.000000e+00> : vector<1x128xf32>
    %89 = tpu.matmul %68, %6, %cst_27 {dimension_numbers = #tpu.dot_dimension_numbers<[1], [0], [0], [1], [0, 0, 1, 1], [], []>} : vector<1x32xf32>, vector<32x128xf32>, vector<1x128xf32> -> vector<1x128xf32>
    %90 = arith.addf %88, %89 : vector<1x128xf32>
    %91 = arith.negf %90 : vector<1x128xf32>
    %92 = math.exp %91 : vector<1x128xf32>
    %cst_28 = arith.constant 1.000000e+00 : f32
    %93 = vector.broadcast %cst_28 : f32 to vector<1x128xf32>
    %94 = arith.addf %93, %92 : vector<1x128xf32>
    %95 = arith.divf %93, %94 : vector<1x128xf32>
    %96 = math.tanh %90 : vector<1x128xf32>
    %97 = vector.extract_strided_slice %95 {offsets = [0, 0], sizes = [1, 32], strides = [1, 1]} : vector<1x128xf32> to vector<1x32xf32>
    %98 = vector.extract_strided_slice %95 {offsets = [0, 32], sizes = [1, 32], strides = [1, 1]} : vector<1x128xf32> to vector<1x32xf32>
    %99 = vector.extract_strided_slice %96 {offsets = [0, 64], sizes = [1, 32], strides = [1, 1]} : vector<1x128xf32> to vector<1x32xf32>
    %100 = vector.extract_strided_slice %95 {offsets = [0, 96], sizes = [1, 32], strides = [1, 1]} : vector<1x128xf32> to vector<1x32xf32>
    %101 = arith.mulf %98, %66 : vector<1x32xf32>
    %102 = arith.mulf %97, %99 : vector<1x32xf32>
    %103 = arith.addf %101, %102 : vector<1x32xf32>
    %104 = math.tanh %103 : vector<1x32xf32>
    %105 = arith.mulf %100, %104 : vector<1x32xf32>
    %cst_29 = arith.constant dense<0.000000e+00> : vector<1x128xf32>
    %106 = tpu.matmul %105, %7, %cst_29 {dimension_numbers = #tpu.dot_dimension_numbers<[1], [0], [0], [1], [0, 0, 1, 1], [], []>} : vector<1x32xf32>, vector<32x128xf32>, vector<1x128xf32> -> vector<1x128xf32>
    %cst_30 = arith.constant dense<0.000000e+00> : vector<1x128xf32>
    %107 = tpu.matmul %87, %8, %cst_30 {dimension_numbers = #tpu.dot_dimension_numbers<[1], [0], [0], [1], [0, 0, 1, 1], [], []>} : vector<1x32xf32>, vector<32x128xf32>, vector<1x128xf32> -> vector<1x128xf32>
    %108 = arith.addf %106, %107 : vector<1x128xf32>
    %109 = arith.addf %108, %9 : vector<1x128xf32>
    %110 = arith.negf %109 : vector<1x128xf32>
    %111 = math.exp %110 : vector<1x128xf32>
    %cst_31 = arith.constant 1.000000e+00 : f32
    %112 = vector.broadcast %cst_31 : f32 to vector<1x128xf32>
    %113 = arith.addf %112, %111 : vector<1x128xf32>
    %114 = arith.divf %112, %113 : vector<1x128xf32>
    %115 = math.tanh %109 : vector<1x128xf32>
    %116 = vector.extract_strided_slice %114 {offsets = [0, 0], sizes = [1, 32], strides = [1, 1]} : vector<1x128xf32> to vector<1x32xf32>
    %117 = vector.extract_strided_slice %114 {offsets = [0, 32], sizes = [1, 32], strides = [1, 1]} : vector<1x128xf32> to vector<1x32xf32>
    %118 = vector.extract_strided_slice %115 {offsets = [0, 64], sizes = [1, 32], strides = [1, 1]} : vector<1x128xf32> to vector<1x32xf32>
    %119 = vector.extract_strided_slice %114 {offsets = [0, 96], sizes = [1, 32], strides = [1, 1]} : vector<1x128xf32> to vector<1x32xf32>
    %120 = arith.mulf %117, %85 : vector<1x32xf32>
    %121 = arith.mulf %116, %118 : vector<1x32xf32>
    %122 = arith.addf %120, %121 : vector<1x32xf32>
    %123 = math.tanh %122 : vector<1x32xf32>
    %124 = arith.mulf %119, %123 : vector<1x32xf32>
    %125 = vector.extract_strided_slice %5 {offsets = [3, 0], sizes = [1, 128], strides = [1, 1]} : vector<8x128xf32> to vector<1x128xf32>
    %cst_32 = arith.constant dense<0.000000e+00> : vector<1x128xf32>
    %126 = tpu.matmul %105, %6, %cst_32 {dimension_numbers = #tpu.dot_dimension_numbers<[1], [0], [0], [1], [0, 0, 1, 1], [], []>} : vector<1x32xf32>, vector<32x128xf32>, vector<1x128xf32> -> vector<1x128xf32>
    %127 = arith.addf %125, %126 : vector<1x128xf32>
    %128 = arith.negf %127 : vector<1x128xf32>
    %129 = math.exp %128 : vector<1x128xf32>
    %cst_33 = arith.constant 1.000000e+00 : f32
    %130 = vector.broadcast %cst_33 : f32 to vector<1x128xf32>
    %131 = arith.addf %130, %129 : vector<1x128xf32>
    %132 = arith.divf %130, %131 : vector<1x128xf32>
    %133 = math.tanh %127 : vector<1x128xf32>
    %134 = vector.extract_strided_slice %132 {offsets = [0, 0], sizes = [1, 32], strides = [1, 1]} : vector<1x128xf32> to vector<1x32xf32>
    %135 = vector.extract_strided_slice %132 {offsets = [0, 32], sizes = [1, 32], strides = [1, 1]} : vector<1x128xf32> to vector<1x32xf32>
    %136 = vector.extract_strided_slice %133 {offsets = [0, 64], sizes = [1, 32], strides = [1, 1]} : vector<1x128xf32> to vector<1x32xf32>
    %137 = vector.extract_strided_slice %132 {offsets = [0, 96], sizes = [1, 32], strides = [1, 1]} : vector<1x128xf32> to vector<1x32xf32>
    %138 = arith.mulf %135, %103 : vector<1x32xf32>
    %139 = arith.mulf %134, %136 : vector<1x32xf32>
    %140 = arith.addf %138, %139 : vector<1x32xf32>
    %141 = math.tanh %140 : vector<1x32xf32>
    %142 = arith.mulf %137, %141 : vector<1x32xf32>
    %cst_34 = arith.constant dense<0.000000e+00> : vector<1x128xf32>
    %143 = tpu.matmul %142, %7, %cst_34 {dimension_numbers = #tpu.dot_dimension_numbers<[1], [0], [0], [1], [0, 0, 1, 1], [], []>} : vector<1x32xf32>, vector<32x128xf32>, vector<1x128xf32> -> vector<1x128xf32>
    %cst_35 = arith.constant dense<0.000000e+00> : vector<1x128xf32>
    %144 = tpu.matmul %124, %8, %cst_35 {dimension_numbers = #tpu.dot_dimension_numbers<[1], [0], [0], [1], [0, 0, 1, 1], [], []>} : vector<1x32xf32>, vector<32x128xf32>, vector<1x128xf32> -> vector<1x128xf32>
    %145 = arith.addf %143, %144 : vector<1x128xf32>
    %146 = arith.addf %145, %9 : vector<1x128xf32>
    %147 = arith.negf %146 : vector<1x128xf32>
    %148 = math.exp %147 : vector<1x128xf32>
    %cst_36 = arith.constant 1.000000e+00 : f32
    %149 = vector.broadcast %cst_36 : f32 to vector<1x128xf32>
    %150 = arith.addf %149, %148 : vector<1x128xf32>
    %151 = arith.divf %149, %150 : vector<1x128xf32>
    %152 = math.tanh %146 : vector<1x128xf32>
    %153 = vector.extract_strided_slice %151 {offsets = [0, 0], sizes = [1, 32], strides = [1, 1]} : vector<1x128xf32> to vector<1x32xf32>
    %154 = vector.extract_strided_slice %151 {offsets = [0, 32], sizes = [1, 32], strides = [1, 1]} : vector<1x128xf32> to vector<1x32xf32>
    %155 = vector.extract_strided_slice %152 {offsets = [0, 64], sizes = [1, 32], strides = [1, 1]} : vector<1x128xf32> to vector<1x32xf32>
    %156 = vector.extract_strided_slice %151 {offsets = [0, 96], sizes = [1, 32], strides = [1, 1]} : vector<1x128xf32> to vector<1x32xf32>
    %157 = arith.mulf %154, %122 : vector<1x32xf32>
    %158 = arith.mulf %153, %155 : vector<1x32xf32>
    %159 = arith.addf %157, %158 : vector<1x32xf32>
    %160 = math.tanh %159 : vector<1x32xf32>
    %161 = arith.mulf %156, %160 : vector<1x32xf32>
    %162 = vector.extract_strided_slice %5 {offsets = [4, 0], sizes = [1, 128], strides = [1, 1]} : vector<8x128xf32> to vector<1x128xf32>
    %cst_37 = arith.constant dense<0.000000e+00> : vector<1x128xf32>
    %163 = tpu.matmul %142, %6, %cst_37 {dimension_numbers = #tpu.dot_dimension_numbers<[1], [0], [0], [1], [0, 0, 1, 1], [], []>} : vector<1x32xf32>, vector<32x128xf32>, vector<1x128xf32> -> vector<1x128xf32>
    %164 = arith.addf %162, %163 : vector<1x128xf32>
    %165 = arith.negf %164 : vector<1x128xf32>
    %166 = math.exp %165 : vector<1x128xf32>
    %cst_38 = arith.constant 1.000000e+00 : f32
    %167 = vector.broadcast %cst_38 : f32 to vector<1x128xf32>
    %168 = arith.addf %167, %166 : vector<1x128xf32>
    %169 = arith.divf %167, %168 : vector<1x128xf32>
    %170 = math.tanh %164 : vector<1x128xf32>
    %171 = vector.extract_strided_slice %169 {offsets = [0, 0], sizes = [1, 32], strides = [1, 1]} : vector<1x128xf32> to vector<1x32xf32>
    %172 = vector.extract_strided_slice %169 {offsets = [0, 32], sizes = [1, 32], strides = [1, 1]} : vector<1x128xf32> to vector<1x32xf32>
    %173 = vector.extract_strided_slice %170 {offsets = [0, 64], sizes = [1, 32], strides = [1, 1]} : vector<1x128xf32> to vector<1x32xf32>
    %174 = vector.extract_strided_slice %169 {offsets = [0, 96], sizes = [1, 32], strides = [1, 1]} : vector<1x128xf32> to vector<1x32xf32>
    %175 = arith.mulf %172, %140 : vector<1x32xf32>
    %176 = arith.mulf %171, %173 : vector<1x32xf32>
    %177 = arith.addf %175, %176 : vector<1x32xf32>
    %178 = math.tanh %177 : vector<1x32xf32>
    %179 = arith.mulf %174, %178 : vector<1x32xf32>
    %cst_39 = arith.constant dense<0.000000e+00> : vector<1x128xf32>
    %180 = tpu.matmul %179, %7, %cst_39 {dimension_numbers = #tpu.dot_dimension_numbers<[1], [0], [0], [1], [0, 0, 1, 1], [], []>} : vector<1x32xf32>, vector<32x128xf32>, vector<1x128xf32> -> vector<1x128xf32>
    %cst_40 = arith.constant dense<0.000000e+00> : vector<1x128xf32>
    %181 = tpu.matmul %161, %8, %cst_40 {dimension_numbers = #tpu.dot_dimension_numbers<[1], [0], [0], [1], [0, 0, 1, 1], [], []>} : vector<1x32xf32>, vector<32x128xf32>, vector<1x128xf32> -> vector<1x128xf32>
    %182 = arith.addf %180, %181 : vector<1x128xf32>
    %183 = arith.addf %182, %9 : vector<1x128xf32>
    %184 = arith.negf %183 : vector<1x128xf32>
    %185 = math.exp %184 : vector<1x128xf32>
    %cst_41 = arith.constant 1.000000e+00 : f32
    %186 = vector.broadcast %cst_41 : f32 to vector<1x128xf32>
    %187 = arith.addf %186, %185 : vector<1x128xf32>
    %188 = arith.divf %186, %187 : vector<1x128xf32>
    %189 = math.tanh %183 : vector<1x128xf32>
    %190 = vector.extract_strided_slice %188 {offsets = [0, 0], sizes = [1, 32], strides = [1, 1]} : vector<1x128xf32> to vector<1x32xf32>
    %191 = vector.extract_strided_slice %188 {offsets = [0, 32], sizes = [1, 32], strides = [1, 1]} : vector<1x128xf32> to vector<1x32xf32>
    %192 = vector.extract_strided_slice %189 {offsets = [0, 64], sizes = [1, 32], strides = [1, 1]} : vector<1x128xf32> to vector<1x32xf32>
    %193 = vector.extract_strided_slice %188 {offsets = [0, 96], sizes = [1, 32], strides = [1, 1]} : vector<1x128xf32> to vector<1x32xf32>
    %194 = arith.mulf %191, %159 : vector<1x32xf32>
    %195 = arith.mulf %190, %192 : vector<1x32xf32>
    %196 = arith.addf %194, %195 : vector<1x32xf32>
    %197 = math.tanh %196 : vector<1x32xf32>
    %198 = arith.mulf %193, %197 : vector<1x32xf32>
    %199 = vector.extract_strided_slice %5 {offsets = [5, 0], sizes = [1, 128], strides = [1, 1]} : vector<8x128xf32> to vector<1x128xf32>
    %cst_42 = arith.constant dense<0.000000e+00> : vector<1x128xf32>
    %200 = tpu.matmul %179, %6, %cst_42 {dimension_numbers = #tpu.dot_dimension_numbers<[1], [0], [0], [1], [0, 0, 1, 1], [], []>} : vector<1x32xf32>, vector<32x128xf32>, vector<1x128xf32> -> vector<1x128xf32>
    %201 = arith.addf %199, %200 : vector<1x128xf32>
    %202 = arith.negf %201 : vector<1x128xf32>
    %203 = math.exp %202 : vector<1x128xf32>
    %cst_43 = arith.constant 1.000000e+00 : f32
    %204 = vector.broadcast %cst_43 : f32 to vector<1x128xf32>
    %205 = arith.addf %204, %203 : vector<1x128xf32>
    %206 = arith.divf %204, %205 : vector<1x128xf32>
    %207 = math.tanh %201 : vector<1x128xf32>
    %208 = vector.extract_strided_slice %206 {offsets = [0, 0], sizes = [1, 32], strides = [1, 1]} : vector<1x128xf32> to vector<1x32xf32>
    %209 = vector.extract_strided_slice %206 {offsets = [0, 32], sizes = [1, 32], strides = [1, 1]} : vector<1x128xf32> to vector<1x32xf32>
    %210 = vector.extract_strided_slice %207 {offsets = [0, 64], sizes = [1, 32], strides = [1, 1]} : vector<1x128xf32> to vector<1x32xf32>
    %211 = vector.extract_strided_slice %206 {offsets = [0, 96], sizes = [1, 32], strides = [1, 1]} : vector<1x128xf32> to vector<1x32xf32>
    %212 = arith.mulf %209, %177 : vector<1x32xf32>
    %213 = arith.mulf %208, %210 : vector<1x32xf32>
    %214 = arith.addf %212, %213 : vector<1x32xf32>
    %215 = math.tanh %214 : vector<1x32xf32>
    %216 = arith.mulf %211, %215 : vector<1x32xf32>
    %cst_44 = arith.constant dense<0.000000e+00> : vector<1x128xf32>
    %217 = tpu.matmul %216, %7, %cst_44 {dimension_numbers = #tpu.dot_dimension_numbers<[1], [0], [0], [1], [0, 0, 1, 1], [], []>} : vector<1x32xf32>, vector<32x128xf32>, vector<1x128xf32> -> vector<1x128xf32>
    %cst_45 = arith.constant dense<0.000000e+00> : vector<1x128xf32>
    %218 = tpu.matmul %198, %8, %cst_45 {dimension_numbers = #tpu.dot_dimension_numbers<[1], [0], [0], [1], [0, 0, 1, 1], [], []>} : vector<1x32xf32>, vector<32x128xf32>, vector<1x128xf32> -> vector<1x128xf32>
    %219 = arith.addf %217, %218 : vector<1x128xf32>
    %220 = arith.addf %219, %9 : vector<1x128xf32>
    %221 = arith.negf %220 : vector<1x128xf32>
    %222 = math.exp %221 : vector<1x128xf32>
    %cst_46 = arith.constant 1.000000e+00 : f32
    %223 = vector.broadcast %cst_46 : f32 to vector<1x128xf32>
    %224 = arith.addf %223, %222 : vector<1x128xf32>
    %225 = arith.divf %223, %224 : vector<1x128xf32>
    %226 = math.tanh %220 : vector<1x128xf32>
    %227 = vector.extract_strided_slice %225 {offsets = [0, 0], sizes = [1, 32], strides = [1, 1]} : vector<1x128xf32> to vector<1x32xf32>
    %228 = vector.extract_strided_slice %225 {offsets = [0, 32], sizes = [1, 32], strides = [1, 1]} : vector<1x128xf32> to vector<1x32xf32>
    %229 = vector.extract_strided_slice %226 {offsets = [0, 64], sizes = [1, 32], strides = [1, 1]} : vector<1x128xf32> to vector<1x32xf32>
    %230 = vector.extract_strided_slice %225 {offsets = [0, 96], sizes = [1, 32], strides = [1, 1]} : vector<1x128xf32> to vector<1x32xf32>
    %231 = arith.mulf %228, %196 : vector<1x32xf32>
    %232 = arith.mulf %227, %229 : vector<1x32xf32>
    %233 = arith.addf %231, %232 : vector<1x32xf32>
    %234 = math.tanh %233 : vector<1x32xf32>
    %235 = arith.mulf %230, %234 : vector<1x32xf32>
    %236 = vector.extract_strided_slice %5 {offsets = [6, 0], sizes = [1, 128], strides = [1, 1]} : vector<8x128xf32> to vector<1x128xf32>
    %cst_47 = arith.constant dense<0.000000e+00> : vector<1x128xf32>
    %237 = tpu.matmul %216, %6, %cst_47 {dimension_numbers = #tpu.dot_dimension_numbers<[1], [0], [0], [1], [0, 0, 1, 1], [], []>} : vector<1x32xf32>, vector<32x128xf32>, vector<1x128xf32> -> vector<1x128xf32>
    %238 = arith.addf %236, %237 : vector<1x128xf32>
    %239 = arith.negf %238 : vector<1x128xf32>
    %240 = math.exp %239 : vector<1x128xf32>
    %cst_48 = arith.constant 1.000000e+00 : f32
    %241 = vector.broadcast %cst_48 : f32 to vector<1x128xf32>
    %242 = arith.addf %241, %240 : vector<1x128xf32>
    %243 = arith.divf %241, %242 : vector<1x128xf32>
    %244 = math.tanh %238 : vector<1x128xf32>
    %245 = vector.extract_strided_slice %243 {offsets = [0, 0], sizes = [1, 32], strides = [1, 1]} : vector<1x128xf32> to vector<1x32xf32>
    %246 = vector.extract_strided_slice %243 {offsets = [0, 32], sizes = [1, 32], strides = [1, 1]} : vector<1x128xf32> to vector<1x32xf32>
    %247 = vector.extract_strided_slice %244 {offsets = [0, 64], sizes = [1, 32], strides = [1, 1]} : vector<1x128xf32> to vector<1x32xf32>
    %248 = vector.extract_strided_slice %243 {offsets = [0, 96], sizes = [1, 32], strides = [1, 1]} : vector<1x128xf32> to vector<1x32xf32>
    %249 = arith.mulf %246, %214 : vector<1x32xf32>
    %250 = arith.mulf %245, %247 : vector<1x32xf32>
    %251 = arith.addf %249, %250 : vector<1x32xf32>
    %252 = math.tanh %251 : vector<1x32xf32>
    %253 = arith.mulf %248, %252 : vector<1x32xf32>
    %cst_49 = arith.constant dense<0.000000e+00> : vector<1x128xf32>
    %254 = tpu.matmul %253, %7, %cst_49 {dimension_numbers = #tpu.dot_dimension_numbers<[1], [0], [0], [1], [0, 0, 1, 1], [], []>} : vector<1x32xf32>, vector<32x128xf32>, vector<1x128xf32> -> vector<1x128xf32>
    %cst_50 = arith.constant dense<0.000000e+00> : vector<1x128xf32>
    %255 = tpu.matmul %235, %8, %cst_50 {dimension_numbers = #tpu.dot_dimension_numbers<[1], [0], [0], [1], [0, 0, 1, 1], [], []>} : vector<1x32xf32>, vector<32x128xf32>, vector<1x128xf32> -> vector<1x128xf32>
    %256 = arith.addf %254, %255 : vector<1x128xf32>
    %257 = arith.addf %256, %9 : vector<1x128xf32>
    %258 = arith.negf %257 : vector<1x128xf32>
    %259 = math.exp %258 : vector<1x128xf32>
    %cst_51 = arith.constant 1.000000e+00 : f32
    %260 = vector.broadcast %cst_51 : f32 to vector<1x128xf32>
    %261 = arith.addf %260, %259 : vector<1x128xf32>
    %262 = arith.divf %260, %261 : vector<1x128xf32>
    %263 = math.tanh %257 : vector<1x128xf32>
    %264 = vector.extract_strided_slice %262 {offsets = [0, 0], sizes = [1, 32], strides = [1, 1]} : vector<1x128xf32> to vector<1x32xf32>
    %265 = vector.extract_strided_slice %262 {offsets = [0, 32], sizes = [1, 32], strides = [1, 1]} : vector<1x128xf32> to vector<1x32xf32>
    %266 = vector.extract_strided_slice %263 {offsets = [0, 64], sizes = [1, 32], strides = [1, 1]} : vector<1x128xf32> to vector<1x32xf32>
    %267 = vector.extract_strided_slice %262 {offsets = [0, 96], sizes = [1, 32], strides = [1, 1]} : vector<1x128xf32> to vector<1x32xf32>
    %268 = arith.mulf %265, %233 : vector<1x32xf32>
    %269 = arith.mulf %264, %266 : vector<1x32xf32>
    %270 = arith.addf %268, %269 : vector<1x32xf32>
    %271 = math.tanh %270 : vector<1x32xf32>
    %272 = arith.mulf %267, %271 : vector<1x32xf32>
    %273 = vector.extract_strided_slice %5 {offsets = [7, 0], sizes = [1, 128], strides = [1, 1]} : vector<8x128xf32> to vector<1x128xf32>
    %cst_52 = arith.constant dense<0.000000e+00> : vector<1x128xf32>
    %274 = tpu.matmul %253, %6, %cst_52 {dimension_numbers = #tpu.dot_dimension_numbers<[1], [0], [0], [1], [0, 0, 1, 1], [], []>} : vector<1x32xf32>, vector<32x128xf32>, vector<1x128xf32> -> vector<1x128xf32>
    %275 = arith.addf %273, %274 : vector<1x128xf32>
    %276 = arith.negf %275 : vector<1x128xf32>
    %277 = math.exp %276 : vector<1x128xf32>
    %cst_53 = arith.constant 1.000000e+00 : f32
    %278 = vector.broadcast %cst_53 : f32 to vector<1x128xf32>
    %279 = arith.addf %278, %277 : vector<1x128xf32>
    %280 = arith.divf %278, %279 : vector<1x128xf32>
    %281 = math.tanh %275 : vector<1x128xf32>
    %282 = vector.extract_strided_slice %280 {offsets = [0, 0], sizes = [1, 32], strides = [1, 1]} : vector<1x128xf32> to vector<1x32xf32>
    %283 = vector.extract_strided_slice %280 {offsets = [0, 32], sizes = [1, 32], strides = [1, 1]} : vector<1x128xf32> to vector<1x32xf32>
    %284 = vector.extract_strided_slice %281 {offsets = [0, 64], sizes = [1, 32], strides = [1, 1]} : vector<1x128xf32> to vector<1x32xf32>
    %285 = vector.extract_strided_slice %280 {offsets = [0, 96], sizes = [1, 32], strides = [1, 1]} : vector<1x128xf32> to vector<1x32xf32>
    %286 = arith.mulf %283, %251 : vector<1x32xf32>
    %287 = arith.mulf %282, %284 : vector<1x32xf32>
    %288 = arith.addf %286, %287 : vector<1x32xf32>
    %289 = math.tanh %288 : vector<1x32xf32>
    %290 = arith.mulf %285, %289 : vector<1x32xf32>
    %cst_54 = arith.constant dense<0.000000e+00> : vector<1x128xf32>
    %291 = tpu.matmul %290, %7, %cst_54 {dimension_numbers = #tpu.dot_dimension_numbers<[1], [0], [0], [1], [0, 0, 1, 1], [], []>} : vector<1x32xf32>, vector<32x128xf32>, vector<1x128xf32> -> vector<1x128xf32>
    %cst_55 = arith.constant dense<0.000000e+00> : vector<1x128xf32>
    %292 = tpu.matmul %272, %8, %cst_55 {dimension_numbers = #tpu.dot_dimension_numbers<[1], [0], [0], [1], [0, 0, 1, 1], [], []>} : vector<1x32xf32>, vector<32x128xf32>, vector<1x128xf32> -> vector<1x128xf32>
    %293 = arith.addf %291, %292 : vector<1x128xf32>
    %294 = arith.addf %293, %9 : vector<1x128xf32>
    %295 = arith.negf %294 : vector<1x128xf32>
    %296 = math.exp %295 : vector<1x128xf32>
    %cst_56 = arith.constant 1.000000e+00 : f32
    %297 = vector.broadcast %cst_56 : f32 to vector<1x128xf32>
    %298 = arith.addf %297, %296 : vector<1x128xf32>
    %299 = arith.divf %297, %298 : vector<1x128xf32>
    %300 = math.tanh %294 : vector<1x128xf32>
    %301 = vector.extract_strided_slice %299 {offsets = [0, 0], sizes = [1, 32], strides = [1, 1]} : vector<1x128xf32> to vector<1x32xf32>
    %302 = vector.extract_strided_slice %299 {offsets = [0, 32], sizes = [1, 32], strides = [1, 1]} : vector<1x128xf32> to vector<1x32xf32>
    %303 = vector.extract_strided_slice %300 {offsets = [0, 64], sizes = [1, 32], strides = [1, 1]} : vector<1x128xf32> to vector<1x32xf32>
    %304 = vector.extract_strided_slice %299 {offsets = [0, 96], sizes = [1, 32], strides = [1, 1]} : vector<1x128xf32> to vector<1x32xf32>
    %305 = arith.mulf %302, %270 : vector<1x32xf32>
    %306 = arith.mulf %301, %303 : vector<1x32xf32>
    %307 = arith.addf %305, %306 : vector<1x32xf32>
    %308 = math.tanh %307 : vector<1x32xf32>
    %309 = arith.mulf %304, %308 : vector<1x32xf32>
    %310 = tpu.concatenate %50, %87, %124, %161, %198, %235, %272, %309 in 0 : vector<1x32xf32>, vector<1x32xf32>, vector<1x32xf32>, vector<1x32xf32>, vector<1x32xf32>, vector<1x32xf32>, vector<1x32xf32>, vector<1x32xf32> -> vector<8x32xf32>
    %c0_57 = arith.constant 0 : index
    %c0_58 = arith.constant 0 : index
    %311 = vector.load %arg7[%c0_57, %c0_58] : memref<32x26xf32, #tpu.memory_space<vmem>>, vector<32x26xf32>
    %cst_59 = arith.constant dense<0.000000e+00> : vector<8x26xf32>
    %312 = tpu.matmul %310, %311, %cst_59 {dimension_numbers = #tpu.dot_dimension_numbers<[1], [0], [0], [1], [0, 0, 1, 1], [], []>} : vector<8x32xf32>, vector<32x26xf32>, vector<8x26xf32> -> vector<8x26xf32>
    %c0_60 = arith.constant 0 : index
    %c0_61 = arith.constant 0 : index
    %313 = vector.load %arg8[%c0_60, %c0_61] : memref<1x26xf32, #tpu.memory_space<vmem>>, vector<1x26xf32>
    %314 = vector.broadcast %313 : vector<1x26xf32> to vector<8x26xf32>
    %315 = arith.addf %312, %314 : vector<8x26xf32>
    %316 = math.tanh %315 : vector<8x26xf32>
    %c0_62 = arith.constant 0 : index
    %c0_63 = arith.constant 0 : index
    %317 = vector.load %arg9[%c0_62, %c0_63] : memref<26x2xf32, #tpu.memory_space<vmem>>, vector<26x2xf32>
    %cst_64 = arith.constant dense<0.000000e+00> : vector<8x2xf32>
    %318 = tpu.matmul %316, %317, %cst_64 {dimension_numbers = #tpu.dot_dimension_numbers<[1], [0], [0], [1], [0, 0, 1, 1], [], []>} : vector<8x26xf32>, vector<26x2xf32>, vector<8x2xf32> -> vector<8x2xf32>
    %c0_65 = arith.constant 0 : index
    %c0_66 = arith.constant 0 : index
    %319 = vector.load %arg10[%c0_65, %c0_66] : memref<1x2xf32, #tpu.memory_space<vmem>>, vector<1x2xf32>
    %320 = vector.broadcast %319 : vector<1x2xf32> to vector<8x2xf32>
    %321 = arith.addf %318, %320 : vector<8x2xf32>
    %cst_67 = arith.constant dense<0xFF800000> : vector<8xf32>
    %322 = vector.multi_reduction <maximumf>, %321, %cst_67 [1] : vector<8x2xf32> to vector<8xf32>
    %323 = vector.shape_cast %322 : vector<8xf32> to vector<8x1xf32>
    %324 = vector.broadcast %323 : vector<8x1xf32> to vector<8x2xf32>
    %325 = arith.subf %321, %324 : vector<8x2xf32>
    %326 = math.exp %325 : vector<8x2xf32>
    %cst_68 = arith.constant dense<0.000000e+00> : vector<8xf32>
    %327 = vector.multi_reduction <add>, %326, %cst_68 [1] : vector<8x2xf32> to vector<8xf32>
    %328 = vector.shape_cast %327 : vector<8xf32> to vector<8x1xf32>
    %329 = vector.broadcast %328 : vector<8x1xf32> to vector<8x2xf32>
    %330 = arith.divf %326, %329 : vector<8x2xf32>
    %c0_69 = arith.constant 0 : index
    %c0_70 = arith.constant 0 : index
    %331 = vector.load %arg11[%c0_69, %c0_70] : memref<8x2xf32, #tpu.memory_space<vmem>>, vector<8x2xf32>
    tpu.vector_store %arg11[%c0_69, %c0_70], %330 {strides = array<i32>} : memref<8x2xf32, #tpu.memory_space<vmem>>, vector<8x2xf32>,
    return
  }
}

</mosaic_0001>

<llo_original>
// kernel: tpu_custom_call.1
$region0: #{tpu_custom_call.1}
  #allocation0 [shape = 'u32[]', space=smem, size = 0x4, offset = 0x4, fixed_abs, tag = 'smem constant byte address 0x4 - core index']
  #allocation1 [shape = 'u32[72,128]{1,0:T(1,128)}', space=vmem, size = 0x9000, scoped, tag = 'internal scratch']
  %s0 = inlined_call_operand.hbm [shape: f32[8,16], index: 0, kind: input, shape index: {}]
  %s1 = inlined_call_operand.hbm [shape: f32[16,128], index: 1, kind: input, shape index: {}]
  %s2 = inlined_call_operand.vmem [shape: f32[32,128], index: 2, kind: input, shape index: {}]
  %s3 = inlined_call_operand.vmem [shape: f32[1,128], index: 3, kind: input, shape index: {}]
  %s4 = inlined_call_operand.hbm [shape: f32[32,128], index: 4, kind: input, shape index: {}]
  %s5 = inlined_call_operand.hbm [shape: f32[32,128], index: 5, kind: input, shape index: {}]
  %s6 = inlined_call_operand.vmem [shape: f32[1,128], index: 6, kind: input, shape index: {}]
  %s7 = inlined_call_operand.hbm [shape: f32[32,26], index: 7, kind: input, shape index: {}]
  %s8 = inlined_call_operand.vmem [shape: f32[1,26], index: 8, kind: input, shape index: {}]
  %s9 = inlined_call_operand.vmem [shape: f32[26,2], index: 9, kind: input, shape index: {}]
  %s10 = inlined_call_operand.vmem [shape: f32[1,2], index: 10, kind: input, shape index: {}]
  %s11 = inlined_call_operand.vmem [shape: f32[8,2], index: 11, kind: output, shape index: {}]
  %s12 = sld [smem:[#allocation0]]
  $region74: #{tpu_custom_call.1} parent=0
    _
  %s14 = ssub.s32 1, %s12
  %s15 = scalar_select 0, %s14, %s12
  $region1: #{tpu_custom_call.1} parent=0
    #allocation2 [shape = 'u8[4096]{0}', space=vmem, size = 0x1000, scoped, tag = 'input window, operand 0, single buffered']
    #allocation3 [shape = 's32[1]{0}', space=sflag, size = 0x4, scoped, tag = 'scoped memory for tpu_custom_call.1']
    #allocation4 [shape = 'u8[8192]{0}', space=vmem, size = 0x2000, scoped, tag = 'input window, operand 1, single buffered']
    #allocation5 [shape = 's32[1]{0}', space=sflag, size = 0x4, scoped, tag = 'scoped memory for tpu_custom_call.1']
    #allocation6 [shape = 'u8[16384]{0}', space=vmem, size = 0x4000, scoped, tag = 'input window, operand 4, single buffered']
    #allocation7 [shape = 'u8[16384]{0}', space=vmem, size = 0x4000, scoped, tag = 'input window, operand 5, single buffered']
    #allocation8 [shape = 's32[1]{0}', space=sflag, size = 0x4, scoped, tag = 'scoped memory for tpu_custom_call.1']
    #allocation9 [shape = 'u8[16384]{0}', space=vmem, size = 0x4000, scoped, tag = 'input window, operand 7, single buffered']
    %16 = vsyncpa [#allocation3], 0
    %17 = vsyncpa [#allocation5], 0
    %18 = vsyncpa [#allocation8], 0
    // Predicated region
    $region2: #{tpu_custom_call.1} parent=1 // pred_check
      _
    $region3: #{tpu_custom_call.1} parent=1 // pred_check_branch
      %20 = sbr.rel (0) target = $region5
    $region4: #{tpu_custom_call.1} parent=1 // pred_region
      %22 = vsyncadd [#allocation3], 0
      %s24 = sshll.u32 %s0, 4
      %s25 = int_to_ptr.hbm [resolvable:$true] %s24
      %s26 = sshll.u32 [#allocation2], 4
      %s27 = int_to_ptr.vmem [resolvable:$true] %s26
      %29 = dma.hbm_to_vmem [thread:$0]  %s25, 128, %s27, [#allocation3]
    $region5: #{tpu_custom_call.1} parent=1 // pred_fallthru
      _
    // Predicated region
    $region6: #{tpu_custom_call.1} parent=1 // pred_check
      _
    $region7: #{tpu_custom_call.1} parent=1 // pred_check_branch
      %31 = sbr.rel (0) target = $region9
    $region8: #{tpu_custom_call.1} parent=1 // pred_region
      %33 = vsyncadd [#allocation5], 0
      %s34 = sshll.u32 %s1, 4
      %s35 = int_to_ptr.hbm [resolvable:$true] %s34
      %s36 = sshll.u32 [#allocation4], 4
      %s37 = int_to_ptr.vmem [resolvable:$true] %s36
      %42 = dma.hbm_to_vmem [thread:$0]  %s35, 256, %s37, [#allocation5], 128, 128, 8
    $region9: #{tpu_custom_call.1} parent=1 // pred_fallthru
      _
    // Predicated region
    $region10: #{tpu_custom_call.1} parent=1 // pred_check
      _
    $region11: #{tpu_custom_call.1} parent=1 // pred_check_branch
      %44 = sbr.rel (0) target = $region13
    $region12: #{tpu_custom_call.1} parent=1 // pred_region
      _
    $region13: #{tpu_custom_call.1} parent=1 // pred_fallthru
      _
    // Predicated region
    $region14: #{tpu_custom_call.1} parent=1 // pred_check
      _
    $region15: #{tpu_custom_call.1} parent=1 // pred_check_branch
      %46 = sbr.rel (0) target = $region17
    $region16: #{tpu_custom_call.1} parent=1 // pred_region
      _
    $region17: #{tpu_custom_call.1} parent=1 // pred_fallthru
      _
    // Predicated region
    $region18: #{tpu_custom_call.1} parent=1 // pred_check
      _
    $region19: #{tpu_custom_call.1} parent=1 // pred_check_branch
      %48 = sbr.rel (0) target = $region21
    $region20: #{tpu_custom_call.1} parent=1 // pred_region
      %50 = vsyncadd [#allocation5], 0
      %s51 = sshll.u32 %s4, 4
      %s52 = int_to_ptr.hbm [resolvable:$true] %s51
      %s53 = sshll.u32 [#allocation6], 4
      %s54 = int_to_ptr.vmem [resolvable:$true] %s53
      %59 = dma.hbm_to_vmem [thread:$0]  %s52, 512, %s54, [#allocation5], 128, 128, 8
    $region21: #{tpu_custom_call.1} parent=1 // pred_fallthru
      _
    // Predicated region
    $region22: #{tpu_custom_call.1} parent=1 // pred_check
      _
    $region23: #{tpu_custom_call.1} parent=1 // pred_check_branch
      %61 = sbr.rel (0) target = $region25
    $region24: #{tpu_custom_call.1} parent=1 // pred_region
      %63 = vsyncadd [#allocation8], 0
      %s64 = sshll.u32 %s5, 4
      %s65 = int_to_ptr.hbm [resolvable:$true] %s64
      %s66 = sshll.u32 [#allocation7], 4
      %s67 = int_to_ptr.vmem [resolvable:$true] %s66
      %72 = dma.hbm_to_vmem [thread:$0]  %s65, 512, %s67, [#allocation8], 128, 128, 8
    $region25: #{tpu_custom_call.1} parent=1 // pred_fallthru
      _
    // Predicated region
    $region26: #{tpu_custom_call.1} parent=1 // pred_check
      _
    $region27: #{tpu_custom_call.1} parent=1 // pred_check_branch
      %74 = sbr.rel (0) target = $region29
    $region28: #{tpu_custom_call.1} parent=1 // pred_region
      _
    $region29: #{tpu_custom_call.1} parent=1 // pred_fallthru
      _
    // Predicated region
    $region30: #{tpu_custom_call.1} parent=1 // pred_check
      _
    $region31: #{tpu_custom_call.1} parent=1 // pred_check_branch
      %76 = sbr.rel (0) target = $region33
    $region32: #{tpu_custom_call.1} parent=1 // pred_region
      %78 = vsyncadd [#allocation8], 0
      %s79 = sshll.u32 %s7, 4
      %s80 = int_to_ptr.hbm [resolvable:$true] %s79
      %s81 = sshll.u32 [#allocation9], 4
      %s82 = int_to_ptr.vmem [resolvable:$true] %s81
      %87 = dma.hbm_to_vmem [thread:$0]  %s80, 512, %s82, [#allocation8], 128, 128, 8
    $region33: #{tpu_custom_call.1} parent=1 // pred_fallthru
      _
    // Predicated region
    $region34: #{tpu_custom_call.1} parent=1 // pred_check
      _
    $region35: #{tpu_custom_call.1} parent=1 // pred_check_branch
      %89 = sbr.rel (0) target = $region37
    $region36: #{tpu_custom_call.1} parent=1 // pred_region
      _
    $region37: #{tpu_custom_call.1} parent=1 // pred_fallthru
      _
    // Predicated region
    $region38: #{tpu_custom_call.1} parent=1 // pred_check
      _
    $region39: #{tpu_custom_call.1} parent=1 // pred_check_branch
      %91 = sbr.rel (0) target = $region41
    $region40: #{tpu_custom_call.1} parent=1 // pred_region
      _
    $region41: #{tpu_custom_call.1} parent=1 // pred_fallthru
      _
    // Predicated region
    $region42: #{tpu_custom_call.1} parent=1 // pred_check
      _
    $region43: #{tpu_custom_call.1} parent=1 // pred_check_branch
      %93 = sbr.rel (0) target = $region45
    $region44: #{tpu_custom_call.1} parent=1 // pred_region
      _
    $region45: #{tpu_custom_call.1} parent=1 // pred_fallthru
      _
    // Predicated region
    $region46: #{tpu_custom_call.1} parent=1 // pred_check
      _
    $region47: #{tpu_custom_call.1} parent=1 // pred_check_branch
      %95 = sbr.rel (0) target = $region49
    $region48: #{tpu_custom_call.1} parent=1 // pred_region
      %97 = dma.done [#allocation3], 128
    $region49: #{tpu_custom_call.1} parent=1 // pred_fallthru
      _
    // Predicated region
    $region50: #{tpu_custom_call.1} parent=1 // pred_check
      _
    $region51: #{tpu_custom_call.1} parent=1 // pred_check_branch
      %99 = sbr.rel (0) target = $region53
    $region52: #{tpu_custom_call.1} parent=1 // pred_region
      %101 = dma.done [#allocation5], 256
    $region53: #{tpu_custom_call.1} parent=1 // pred_fallthru
      _
    // Predicated region
    $region54: #{tpu_custom_call.1} parent=1 // pred_check
      _
    $region55: #{tpu_custom_call.1} parent=1 // pred_check_branch
      %103 = sbr.rel (0) target = $region57
    $region56: #{tpu_custom_call.1} parent=1 // pred_region
      %105 = dma.done [#allocation5], 512
    $region57: #{tpu_custom_call.1} parent=1 // pred_fallthru
      _
    // Predicated region
    $region58: #{tpu_custom_call.1} parent=1 // pred_check
      _
    $region59: #{tpu_custom_call.1} parent=1 // pred_check_branch
      %107 = sbr.rel (0) target = $region61
    $region60: #{tpu_custom_call.1} parent=1 // pred_region
      %109 = dma.done [#allocation8], 512
    $region61: #{tpu_custom_call.1} parent=1 // pred_fallthru
      _
    // Predicated region
    $region62: #{tpu_custom_call.1} parent=1 // pred_check
      _
    $region63: #{tpu_custom_call.1} parent=1 // pred_check_branch
      %111 = sbr.rel (0) target = $region65
    $region64: #{tpu_custom_call.1} parent=1 // pred_region
      %113 = dma.done [#allocation8], 512
    $region65: #{tpu_custom_call.1} parent=1 // pred_fallthru
      _
    %v114 = vld [vmem:[#allocation2] sm:$0xff]
    %v115 = vld [vmem:[#allocation4] sm:$0xff]
    %v116 = vld [vmem:[#allocation4 + $0x8] sm:$0xff]
    %v117 = vld [vmem:[%s3] sm:$0x1]
    %v119 = vperm.slane %v117, 0
    %vm121 = vcmask 130048
    %v123 = vsel %vm121, %v114, 0
    %125 = vmatpush.msra.mxu0 0.0
    %126 = vmatpush.msra.mxu0 0.0
    %127 = vmatpush.msra.mxu0 0.0
    %128 = vmatpush.msra.mxu0 0.0
    %129 = vmatpush.msra.mxu0 0.0
    %130 = vmatpush.msra.mxu0 0.0
    %131 = vmatpush.msra.mxu0 0.0
    %132 = vmatpush.msra.mxu0 0.0
    %133 = vmatpush.msra.mxu0 0.0
    %134 = vmatpush.msra.mxu0 0.0
    %135 = vmatpush.msra.mxu0 0.0
    %136 = vmatpush.msra.mxu0 0.0
    %137 = vmatpush.msra.mxu0 0.0
    %138 = vmatpush.msra.mxu0 0.0
    %139 = vmatpush.msra.mxu0 %v116
    %140 = vmatpush.msra.mxu0 %v115
    %141 = vmatmul.f32.gmra.mxu0 %v123
    %v142 = vpop.f32.mrf.mxu0
    %v143 = vadd.f32 %v119, %v142
    %144 = vdwg.mxu0
    %v145 = vld [vmem:[%s2] sm:$0xff]
    %v146 = vld [vmem:[%s2 + $0x8] sm:$0xff]
    %v147 = vld [vmem:[%s2 + $0x10] sm:$0xff]
    %v148 = vld [vmem:[%s2 + $0x18] sm:$0xff]
    %v149 = vld [vmem:[#allocation6] sm:$0xff]
    %v150 = vld [vmem:[#allocation6 + $0x8] sm:$0xff]
    %v151 = vld [vmem:[#allocation6 + $0x10] sm:$0xff]
    %v152 = vld [vmem:[#allocation6 + $0x18] sm:$0xff]
    %v153 = vld [vmem:[#allocation7] sm:$0xff]
    %v154 = vld [vmem:[#allocation7 + $0x8] sm:$0xff]
    %v155 = vld [vmem:[#allocation7 + $0x10] sm:$0xff]
    %v156 = vld [vmem:[#allocation7 + $0x18] sm:$0xff]
    %v157 = vld [vmem:[%s6] sm:$0x1]
    %vm158 = vcmask 261120
    %v160 = vsel %vm158, 0.0, 0
    %162 = vmatpush.msra.mxu0 0.0
    %163 = vmatpush.msra.mxu0 0.0
    %164 = vmatpush.msra.mxu0 0.0
    %165 = vmatpush.msra.mxu0 0.0
    %166 = vmatpush.msra.mxu0 0.0
    %167 = vmatpush.msra.mxu0 0.0
    %168 = vmatpush.msra.mxu0 0.0
    %169 = vmatpush.msra.mxu0 0.0
    %170 = vmatpush.msra.mxu0 0.0
    %171 = vmatpush.msra.mxu0 0.0
    %172 = vmatpush.msra.mxu0 0.0
    %173 = vmatpush.msra.mxu0 0.0
    %174 = vmatpush.msra.mxu0 %v148
    %175 = vmatpush.msra.mxu0 %v147
    %176 = vmatpush.msra.mxu0 %v146
    %177 = vmatpush.msra.mxu0 %v145
    %178 = vmatmul.f32.gmra.mxu0 %v160
    %v179 = vpop.f32.mrf.mxu0
    %v180 = vadd.f32 0.0, %v179
    %181 = vdwg.mxu0
    %v182 = vadd.f32 %v143, %v180
    %v183 = vxor.u32 %v182, 2147483648
    %v184 = vmul.f32 %v183, 1.442695
    %v185 = vpow.pop %v184
    %v186 = vadd.f32 %v185, 1.0
    %v187 = vrcp.pop %v186
    %v188 = vmul.f32 %v186, %v187
    %v189 = vsub.f32 1.0, %v188
    %v190 = vmul.f32 %v187, %v189
    %v191 = vadd.f32 %v187, %v190
    %vm192 = vweird.f32 %v186
    %vm193 = vweird.f32 %v187
    %vm194 = vmor %vm192, %vm193
    %v195 = vsel %vm194, %v187, %v191
    %v196 = vand.u32 2147483647, %v186
    %vm197 = vcmp.eq.f32.partialorder %v196, 8.507059e+37
    %v198 = vand.u32 %v186, 2147483648
    %v199 = vor.u32 1.1754944e-38, %v198
    %v200 = vsel %vm197, %v199, %v195
    %v201 = vmul.f32 1.0, %v200
    %v202 = vtanh.pop %v182
    %v203 = vmul.f32 %v201, 0.0
    %205 = vrot.lane.b32.xlu0 %v202, 64
    %v206 = vpop.permute.xlu0 %205
    %v208 = vmul.f32 %v201, %v206
    %210 = vrot.lane.b32.xlu0 %v208, 32
    %v211 = vpop.permute.xlu0 %210
    %v213 = vadd.f32 %v203, %v211
    %v214 = vtanh.pop %v213
    %216 = vrot.lane.b32.xlu0 %v214, 64
    %v217 = vpop.permute.xlu0 %216
    %v219 = vmul.f32 %v201, %v217
    %220 = vmatpush.msra.mxu0 0.0
    %221 = vmatpush.msra.mxu0 0.0
    %222 = vmatpush.msra.mxu0 0.0
    %223 = vmatpush.msra.mxu0 0.0
    %224 = vmatpush.msra.mxu0 0.0
    %225 = vmatpush.msra.mxu0 0.0
    %226 = vmatpush.msra.mxu0 0.0
    %227 = vmatpush.msra.mxu0 0.0
    %228 = vmatpush.msra.mxu0 0.0
    %229 = vmatpush.msra.mxu0 0.0
    %230 = vmatpush.msra.mxu0 0.0
    %231 = vmatpush.msra.mxu0 0.0
    %232 = vmatpush.msra.mxu0 %v156
    %233 = vmatpush.msra.mxu0 %v155
    %234 = vmatpush.msra.mxu0 %v154
    %235 = vmatpush.msra.mxu0 %v153
    %236 = vmatmul.f32.gmra.mxu0 %v160
    %v237 = vpop.f32.mrf.mxu0
    %v238 = vadd.f32 0.0, %v237
    %239 = vdwg.mxu0
    %241 = vrot.lane.b32.xlu0 %v219, 32
    %v242 = vpop.permute.xlu0 %241
    %v243 = vsel %vm158, %v242, 0
    %245 = vmatpush.msra.mxu0 0.0
    %246 = vmatpush.msra.mxu0 0.0
    %247 = vmatpush.msra.mxu0 0.0
    %248 = vmatpush.msra.mxu0 0.0
    %249 = vmatpush.msra.mxu0 0.0
    %250 = vmatpush.msra.mxu0 0.0
    %251 = vmatpush.msra.mxu0 0.0
    %252 = vmatpush.msra.mxu0 0.0
    %253 = vmatpush.msra.mxu0 0.0
    %254 = vmatpush.msra.mxu0 0.0
    %255 = vmatpush.msra.mxu0 0.0
    %256 = vmatpush.msra.mxu0 0.0
    %257 = vmatpush.msra.mxu0 %v152
    %258 = vmatpush.msra.mxu0 %v151
    %259 = vmatpush.msra.mxu0 %v150
    %260 = vmatpush.msra.mxu0 %v149
    %261 = vmatmul.f32.gmra.mxu0 %v243
    %v262 = vpop.f32.mrf.mxu0
    %v263 = vadd.f32 %v238, %v262
    %264 = vdwg.mxu0
    %v265 = vadd.f32 %v263, %v157
    %v266 = vxor.u32 %v265, 2147483648
    %v267 = vmul.f32 %v266, 1.442695
    %v268 = vpow.pop %v267
    %v269 = vadd.f32 %v268, 1.0
    %v270 = vrcp.pop %v269
    %v271 = vmul.f32 %v269, %v270
    %v272 = vsub.f32 1.0, %v271
    %v273 = vmul.f32 %v270, %v272
    %v274 = vadd.f32 %v270, %v273
    %vm275 = vweird.f32 %v269
    %vm276 = vweird.f32 %v270
    %vm277 = vmor %vm275, %vm276
    %v278 = vsel %vm277, %v270, %v274
    %v279 = vand.u32 2147483647, %v269
    %vm280 = vcmp.eq.f32.partialorder %v279, 8.507059e+37
    %v281 = vand.u32 %v269, 2147483648
    %v282 = vor.u32 1.1754944e-38, %v281
    %v283 = vsel %vm280, %v282, %v278
    %v284 = vmul.f32 1.0, %v283
    %v285 = vtanh.pop %v265
    %v286 = vmul.f32 %v284, 0.0
    %288 = vrot.lane.b32.xlu0 %v285, 64
    %v289 = vpop.permute.xlu0 %288
    %v291 = vmul.f32 %v284, %v289
    %293 = vrot.lane.b32.xlu0 %v291, 32
    %v294 = vpop.permute.xlu0 %293
    %v296 = vadd.f32 %v286, %v294
    %v297 = vtanh.pop %v296
    %299 = vrot.lane.b32.xlu0 %v297, 64
    %v300 = vpop.permute.xlu0 %299
    %v302 = vmul.f32 %v284, %v300
    %303 = vmatpush.msra.mxu0 0.0
    %304 = vmatpush.msra.mxu0 0.0
    %305 = vmatpush.msra.mxu0 0.0
    %306 = vmatpush.msra.mxu0 0.0
    %307 = vmatpush.msra.mxu0 0.0
    %308 = vmatpush.msra.mxu0 0.0
    %309 = vmatpush.msra.mxu0 0.0
    %310 = vmatpush.msra.mxu0 0.0
    %311 = vmatpush.msra.mxu0 0.0
    %312 = vmatpush.msra.mxu0 0.0
    %313 = vmatpush.msra.mxu0 0.0
    %314 = vmatpush.msra.mxu0 0.0
    %315 = vmatpush.msra.mxu0 %v148
    %316 = vmatpush.msra.mxu0 %v147
    %317 = vmatpush.msra.mxu0 %v146
    %318 = vmatpush.msra.mxu0 %v145
    %319 = vmatmul.f32.gmra.mxu0 %v243
    %v320 = vpop.f32.mrf.mxu0
    %v321 = vadd.f32 0.0, %v320
    %322 = vdwg.mxu0
    %v324 = vrot.slane %v321, 7
    %v326 = vadd.f32 %v143, %v324
    %v327 = vxor.u32 %v326, 2147483648
    %v328 = vmul.f32 %v327, 1.442695
    %v329 = vpow.pop %v328
    %v330 = vadd.f32 %v329, 1.0
    %v331 = vrcp.pop %v330
    %v332 = vmul.f32 %v330, %v331
    %v333 = vsub.f32 1.0, %v332
    %v334 = vmul.f32 %v331, %v333
    %v335 = vadd.f32 %v331, %v334
    %vm336 = vweird.f32 %v330
    %vm337 = vweird.f32 %v331
    %vm338 = vmor %vm336, %vm337
    %v339 = vsel %vm338, %v331, %v335
    %v340 = vand.u32 2147483647, %v330
    %vm341 = vcmp.eq.f32.partialorder %v340, 8.507059e+37
    %v342 = vand.u32 %v330, 2147483648
    %v343 = vor.u32 1.1754944e-38, %v342
    %v344 = vsel %vm341, %v343, %v339
    %v345 = vmul.f32 1.0, %v344
    %v346 = vtanh.pop %v326
    %v348 = vrot.slane %v213, 7
    %v350 = vmul.f32 %v345, %v348
    %352 = vrot.lane.b32.xlu0 %v346, 64
    %v353 = vpop.permute.xlu0 %352
    %v355 = vmul.f32 %v345, %v353
    %357 = vrot.lane.b32.xlu0 %v355, 32
    %v358 = vpop.permute.xlu0 %357
    %v360 = vadd.f32 %v350, %v358
    %v361 = vtanh.pop %v360
    %363 = vrot.lane.b32.xlu0 %v361, 64
    %v364 = vpop.permute.xlu0 %363
    %v366 = vmul.f32 %v345, %v364
    %368 = vrot.lane.b32.xlu0 %v302, 32
    %v369 = vpop.permute.xlu0 %368
    %v370 = vsel %vm158, %v369, 0
    %372 = vmatpush.msra.mxu0 0.0
    %373 = vmatpush.msra.mxu0 0.0
    %374 = vmatpush.msra.mxu0 0.0
    %375 = vmatpush.msra.mxu0 0.0
    %376 = vmatpush.msra.mxu0 0.0
    %377 = vmatpush.msra.mxu0 0.0
    %378 = vmatpush.msra.mxu0 0.0
    %379 = vmatpush.msra.mxu0 0.0
    %380 = vmatpush.msra.mxu0 0.0
    %381 = vmatpush.msra.mxu0 0.0
    %382 = vmatpush.msra.mxu0 0.0
    %383 = vmatpush.msra.mxu0 0.0
    %384 = vmatpush.msra.mxu0 %v156
    %385 = vmatpush.msra.mxu0 %v155
    %386 = vmatpush.msra.mxu0 %v154
    %387 = vmatpush.msra.mxu0 %v153
    %388 = vmatmul.f32.gmra.mxu0 %v370
    %v389 = vpop.f32.mrf.mxu0
    %v390 = vadd.f32 0.0, %v389
    %391 = vdwg.mxu0
    %v393 = vrot.slane %v366, 1
    %394 = vrot.lane.b32.xlu0 %v393, 32
    %v395 = vpop.permute.xlu0 %394
    %v396 = vsel %vm158, %v395, 0
    %398 = vmatpush.msra.mxu0 0.0
    %399 = vmatpush.msra.mxu0 0.0
    %400 = vmatpush.msra.mxu0 0.0
    %401 = vmatpush.msra.mxu0 0.0
    %402 = vmatpush.msra.mxu0 0.0
    %403 = vmatpush.msra.mxu0 0.0
    %404 = vmatpush.msra.mxu0 0.0
    %405 = vmatpush.msra.mxu0 0.0
    %406 = vmatpush.msra.mxu0 0.0
    %407 = vmatpush.msra.mxu0 0.0
    %408 = vmatpush.msra.mxu0 0.0
    %409 = vmatpush.msra.mxu0 0.0
    %410 = vmatpush.msra.mxu0 %v152
    %411 = vmatpush.msra.mxu0 %v151
    %412 = vmatpush.msra.mxu0 %v150
    %413 = vmatpush.msra.mxu0 %v149
    %414 = vmatmul.f32.gmra.mxu0 %v396
    %v415 = vpop.f32.mrf.mxu0
    %v416 = vadd.f32 %v390, %v415
    %417 = vdwg.mxu0
    %v418 = vadd.f32 %v416, %v157
    %v419 = vxor.u32 %v418, 2147483648
    %v420 = vmul.f32 %v419, 1.442695
    %v421 = vpow.pop %v420
    %v422 = vadd.f32 %v421, 1.0
    %v423 = vrcp.pop %v422
    %v424 = vmul.f32 %v422, %v423
    %v425 = vsub.f32 1.0, %v424
    %v426 = vmul.f32 %v423, %v425
    %v427 = vadd.f32 %v423, %v426
    %vm428 = vweird.f32 %v422
    %vm429 = vweird.f32 %v423
    %vm430 = vmor %vm428, %vm429
    %v431 = vsel %vm430, %v423, %v427
    %v432 = vand.u32 2147483647, %v422
    %vm433 = vcmp.eq.f32.partialorder %v432, 8.507059e+37
    %v434 = vand.u32 %v422, 2147483648
    %v435 = vor.u32 1.1754944e-38, %v434
    %v436 = vsel %vm433, %v435, %v431
    %v437 = vmul.f32 1.0, %v436
    %v438 = vtanh.pop %v418
    %v439 = vmul.f32 %v437, %v296
    %441 = vrot.lane.b32.xlu0 %v438, 64
    %v442 = vpop.permute.xlu0 %441
    %v444 = vmul.f32 %v437, %v442
    %446 = vrot.lane.b32.xlu0 %v444, 32
    %v447 = vpop.permute.xlu0 %446
    %v449 = vadd.f32 %v439, %v447
    %v450 = vtanh.pop %v449
    %452 = vrot.lane.b32.xlu0 %v450, 64
    %v453 = vpop.permute.xlu0 %452
    %v455 = vmul.f32 %v437, %v453
    %456 = vmatpush.msra.mxu0 0.0
    %457 = vmatpush.msra.mxu0 0.0
    %458 = vmatpush.msra.mxu0 0.0
    %459 = vmatpush.msra.mxu0 0.0
    %460 = vmatpush.msra.mxu0 0.0
    %461 = vmatpush.msra.mxu0 0.0
    %462 = vmatpush.msra.mxu0 0.0
    %463 = vmatpush.msra.mxu0 0.0
    %464 = vmatpush.msra.mxu0 0.0
    %465 = vmatpush.msra.mxu0 0.0
    %466 = vmatpush.msra.mxu0 0.0
    %467 = vmatpush.msra.mxu0 0.0
    %468 = vmatpush.msra.mxu0 %v148
    %469 = vmatpush.msra.mxu0 %v147
    %470 = vmatpush.msra.mxu0 %v146
    %471 = vmatpush.msra.mxu0 %v145
    %472 = vmatmul.f32.gmra.mxu0 %v396
    %v473 = vpop.f32.mrf.mxu0
    %v474 = vadd.f32 0.0, %v473
    %475 = vdwg.mxu0
    %v477 = vrot.slane %v474, 6
    %v479 = vadd.f32 %v143, %v477
    %v480 = vxor.u32 %v479, 2147483648
    %v481 = vmul.f32 %v480, 1.442695
    %v482 = vpow.pop %v481
    %v483 = vadd.f32 %v482, 1.0
    %v484 = vrcp.pop %v483
    %v485 = vmul.f32 %v483, %v484
    %v486 = vsub.f32 1.0, %v485
    %v487 = vmul.f32 %v484, %v486
    %v488 = vadd.f32 %v484, %v487
    %vm489 = vweird.f32 %v483
    %vm490 = vweird.f32 %v484
    %vm491 = vmor %vm489, %vm490
    %v492 = vsel %vm491, %v484, %v488
    %v493 = vand.u32 2147483647, %v483
    %vm494 = vcmp.eq.f32.partialorder %v493, 8.507059e+37
    %v495 = vand.u32 %v483, 2147483648
    %v496 = vor.u32 1.1754944e-38, %v495
    %v497 = vsel %vm494, %v496, %v492
    %v498 = vmul.f32 1.0, %v497
    %v499 = vtanh.pop %v479
    %v501 = vrot.slane %v360, 7
    %v503 = vmul.f32 %v498, %v501
    %505 = vrot.lane.b32.xlu0 %v499, 64
    %v506 = vpop.permute.xlu0 %505
    %v508 = vmul.f32 %v498, %v506
    %510 = vrot.lane.b32.xlu0 %v508, 32
    %v511 = vpop.permute.xlu0 %510
    %v513 = vadd.f32 %v503, %v511
    %v514 = vtanh.pop %v513
    %516 = vrot.lane.b32.xlu0 %v514, 64
    %v517 = vpop.permute.xlu0 %516
    %v519 = vmul.f32 %v498, %v517
    %521 = vrot.lane.b32.xlu0 %v455, 32
    %v522 = vpop.permute.xlu0 %521
    %v523 = vsel %vm158, %v522, 0
    %525 = vmatpush.msra.mxu0 0.0
    %526 = vmatpush.msra.mxu0 0.0
    %527 = vmatpush.msra.mxu0 0.0
    %528 = vmatpush.msra.mxu0 0.0
    %529 = vmatpush.msra.mxu0 0.0
    %530 = vmatpush.msra.mxu0 0.0
    %531 = vmatpush.msra.mxu0 0.0
    %532 = vmatpush.msra.mxu0 0.0
    %533 = vmatpush.msra.mxu0 0.0
    %534 = vmatpush.msra.mxu0 0.0
    %535 = vmatpush.msra.mxu0 0.0
    %536 = vmatpush.msra.mxu0 0.0
    %537 = vmatpush.msra.mxu0 %v156
    %538 = vmatpush.msra.mxu0 %v155
    %539 = vmatpush.msra.mxu0 %v154
    %540 = vmatpush.msra.mxu0 %v153
    %541 = vmatmul.f32.gmra.mxu0 %v523
    %v542 = vpop.f32.mrf.mxu0
    %v543 = vadd.f32 0.0, %v542
    %544 = vdwg.mxu0
    %v546 = vrot.slane %v519, 2
    %547 = vrot.lane.b32.xlu0 %v546, 32
    %v548 = vpop.permute.xlu0 %547
    %v549 = vsel %vm158, %v548, 0
    %551 = vmatpush.msra.mxu0 0.0
    %552 = vmatpush.msra.mxu0 0.0
    %553 = vmatpush.msra.mxu0 0.0
    %554 = vmatpush.msra.mxu0 0.0
    %555 = vmatpush.msra.mxu0 0.0
    %556 = vmatpush.msra.mxu0 0.0
    %557 = vmatpush.msra.mxu0 0.0
    %558 = vmatpush.msra.mxu0 0.0
    %559 = vmatpush.msra.mxu0 0.0
    %560 = vmatpush.msra.mxu0 0.0
    %561 = vmatpush.msra.mxu0 0.0
    %562 = vmatpush.msra.mxu0 0.0
    %563 = vmatpush.msra.mxu0 %v152
    %564 = vmatpush.msra.mxu0 %v151
    %565 = vmatpush.msra.mxu0 %v150
    %566 = vmatpush.msra.mxu0 %v149
    %567 = vmatmul.f32.gmra.mxu0 %v549
    %v568 = vpop.f32.mrf.mxu0
    %v569 = vadd.f32 %v543, %v568
    %570 = vdwg.mxu0
    %v571 = vadd.f32 %v569, %v157
    %v572 = vxor.u32 %v571, 2147483648
    %v573 = vmul.f32 %v572, 1.442695
    %v574 = vpow.pop %v573
    %v575 = vadd.f32 %v574, 1.0
    %v576 = vrcp.pop %v575
    %v577 = vmul.f32 %v575, %v576
    %v578 = vsub.f32 1.0, %v577
    %v579 = vmul.f32 %v576, %v578
    %v580 = vadd.f32 %v576, %v579
    %vm581 = vweird.f32 %v575
    %vm582 = vweird.f32 %v576
    %vm583 = vmor %vm581, %vm582
    %v584 = vsel %vm583, %v576, %v580
    %v585 = vand.u32 2147483647, %v575
    %vm586 = vcmp.eq.f32.partialorder %v585, 8.507059e+37
    %v587 = vand.u32 %v575, 2147483648
    %v588 = vor.u32 1.1754944e-38, %v587
    %v589 = vsel %vm586, %v588, %v584
    %v590 = vmul.f32 1.0, %v589
    %v591 = vtanh.pop %v571
    %v592 = vmul.f32 %v590, %v449
    %594 = vrot.lane.b32.xlu0 %v591, 64
    %v595 = vpop.permute.xlu0 %594
    %v597 = vmul.f32 %v590, %v595
    %599 = vrot.lane.b32.xlu0 %v597, 32
    %v600 = vpop.permute.xlu0 %599
    %v602 = vadd.f32 %v592, %v600
    %v603 = vtanh.pop %v602
    %605 = vrot.lane.b32.xlu0 %v603, 64
    %v606 = vpop.permute.xlu0 %605
    %v608 = vmul.f32 %v590, %v606
    %609 = vmatpush.msra.mxu0 0.0
    %610 = vmatpush.msra.mxu0 0.0
    %611 = vmatpush.msra.mxu0 0.0
    %612 = vmatpush.msra.mxu0 0.0
    %613 = vmatpush.msra.mxu0 0.0
    %614 = vmatpush.msra.mxu0 0.0
    %615 = vmatpush.msra.mxu0 0.0
    %616 = vmatpush.msra.mxu0 0.0
    %617 = vmatpush.msra.mxu0 0.0
    %618 = vmatpush.msra.mxu0 0.0
    %619 = vmatpush.msra.mxu0 0.0
    %620 = vmatpush.msra.mxu0 0.0
    %621 = vmatpush.msra.mxu0 %v148
    %622 = vmatpush.msra.mxu0 %v147
    %623 = vmatpush.msra.mxu0 %v146
    %624 = vmatpush.msra.mxu0 %v145
    %625 = vmatmul.f32.gmra.mxu0 %v549
    %v626 = vpop.f32.mrf.mxu0
    %v627 = vadd.f32 0.0, %v626
    %628 = vdwg.mxu0
    %v630 = vrot.slane %v627, 5
    %v632 = vadd.f32 %v143, %v630
    %v633 = vxor.u32 %v632, 2147483648
    %v634 = vmul.f32 %v633, 1.442695
    %v635 = vpow.pop %v634
    %v636 = vadd.f32 %v635, 1.0
    %v637 = vrcp.pop %v636
    %v638 = vmul.f32 %v636, %v637
    %v639 = vsub.f32 1.0, %v638
    %v640 = vmul.f32 %v637, %v639
    %v641 = vadd.f32 %v637, %v640
    %vm642 = vweird.f32 %v636
    %vm643 = vweird.f32 %v637
    %vm644 = vmor %vm642, %vm643
    %v645 = vsel %vm644, %v637, %v641
    %v646 = vand.u32 2147483647, %v636
    %vm647 = vcmp.eq.f32.partialorder %v646, 8.507059e+37
    %v648 = vand.u32 %v636, 2147483648
    %v649 = vor.u32 1.1754944e-38, %v648
    %v650 = vsel %vm647, %v649, %v645
    %v651 = vmul.f32 1.0, %v650
    %v652 = vtanh.pop %v632
    %v654 = vrot.slane %v513, 7
    %v656 = vmul.f32 %v651, %v654
    %658 = vrot.lane.b32.xlu0 %v652, 64
    %v659 = vpop.permute.xlu0 %658
    %v661 = vmul.f32 %v651, %v659
    %663 = vrot.lane.b32.xlu0 %v661, 32
    %v664 = vpop.permute.xlu0 %663
    %v666 = vadd.f32 %v656, %v664
    %v667 = vtanh.pop %v666
    %669 = vrot.lane.b32.xlu0 %v667, 64
    %v670 = vpop.permute.xlu0 %669
    %v672 = vmul.f32 %v651, %v670
    %674 = vrot.lane.b32.xlu0 %v608, 32
    %v675 = vpop.permute.xlu0 %674
    %v676 = vsel %vm158, %v675, 0
    %678 = vmatpush.msra.mxu0 0.0
    %679 = vmatpush.msra.mxu0 0.0
    %680 = vmatpush.msra.mxu0 0.0
    %681 = vmatpush.msra.mxu0 0.0
    %682 = vmatpush.msra.mxu0 0.0
    %683 = vmatpush.msra.mxu0 0.0
    %684 = vmatpush.msra.mxu0 0.0
    %685 = vmatpush.msra.mxu0 0.0
    %686 = vmatpush.msra.mxu0 0.0
    %687 = vmatpush.msra.mxu0 0.0
    %688 = vmatpush.msra.mxu0 0.0
    %689 = vmatpush.msra.mxu0 0.0
    %690 = vmatpush.msra.mxu0 %v156
    %691 = vmatpush.msra.mxu0 %v155
    %692 = vmatpush.msra.mxu0 %v154
    %693 = vmatpush.msra.mxu0 %v153
    %694 = vmatmul.f32.gmra.mxu0 %v676
    %v695 = vpop.f32.mrf.mxu0
    %v696 = vadd.f32 0.0, %v695
    %697 = vdwg.mxu0
    %v699 = vrot.slane %v672, 3
    %700 = vrot.lane.b32.xlu0 %v699, 32
    %v701 = vpop.permute.xlu0 %700
    %v702 = vsel %vm158, %v701, 0
    %704 = vmatpush.msra.mxu0 0.0
    %705 = vmatpush.msra.mxu0 0.0
    %706 = vmatpush.msra.mxu0 0.0
    %707 = vmatpush.msra.mxu0 0.0
    %708 = vmatpush.msra.mxu0 0.0
    %709 = vmatpush.msra.mxu0 0.0
    %710 = vmatpush.msra.mxu0 0.0
    %711 = vmatpush.msra.mxu0 0.0
    %712 = vmatpush.msra.mxu0 0.0
    %713 = vmatpush.msra.mxu0 0.0
    %714 = vmatpush.msra.mxu0 0.0
    %715 = vmatpush.msra.mxu0 0.0
    %716 = vmatpush.msra.mxu0 %v152
    %717 = vmatpush.msra.mxu0 %v151
    %718 = vmatpush.msra.mxu0 %v150
    %719 = vmatpush.msra.mxu0 %v149
    %720 = vmatmul.f32.gmra.mxu0 %v702
    %v721 = vpop.f32.mrf.mxu0
    %v722 = vadd.f32 %v696, %v721
    %723 = vdwg.mxu0
    %v724 = vadd.f32 %v722, %v157
    %v725 = vxor.u32 %v724, 2147483648
    %v726 = vmul.f32 %v725, 1.442695
    %v727 = vpow.pop %v726
    %v728 = vadd.f32 %v727, 1.0
    %v729 = vrcp.pop %v728
    %v730 = vmul.f32 %v728, %v729
    %v731 = vsub.f32 1.0, %v730
    %v732 = vmul.f32 %v729, %v731
    %v733 = vadd.f32 %v729, %v732
    %vm734 = vweird.f32 %v728
    %vm735 = vweird.f32 %v729
    %vm736 = vmor %vm734, %vm735
    %v737 = vsel %vm736, %v729, %v733
    %v738 = vand.u32 2147483647, %v728
    %vm739 = vcmp.eq.f32.partialorder %v738, 8.507059e+37
    %v740 = vand.u32 %v728, 2147483648
    %v741 = vor.u32 1.1754944e-38, %v740
    %v742 = vsel %vm739, %v741, %v737
    %v743 = vmul.f32 1.0, %v742
    %v744 = vtanh.pop %v724
    %v745 = vmul.f32 %v743, %v602
    %747 = vrot.lane.b32.xlu0 %v744, 64
    %v748 = vpop.permute.xlu0 %747
    %v750 = vmul.f32 %v743, %v748
    %752 = vrot.lane.b32.xlu0 %v750, 32
    %v753 = vpop.permute.xlu0 %752
    %v755 = vadd.f32 %v745, %v753
    %v756 = vtanh.pop %v755
    %758 = vrot.lane.b32.xlu0 %v756, 64
    %v759 = vpop.permute.xlu0 %758
    %v761 = vmul.f32 %v743, %v759
    %762 = vmatpush.msra.mxu0 0.0
    %763 = vmatpush.msra.mxu0 0.0
    %764 = vmatpush.msra.mxu0 0.0
    %765 = vmatpush.msra.mxu0 0.0
    %766 = vmatpush.msra.mxu0 0.0
    %767 = vmatpush.msra.mxu0 0.0
    %768 = vmatpush.msra.mxu0 0.0
    %769 = vmatpush.msra.mxu0 0.0
    %770 = vmatpush.msra.mxu0 0.0
    %771 = vmatpush.msra.mxu0 0.0
    %772 = vmatpush.msra.mxu0 0.0
    %773 = vmatpush.msra.mxu0 0.0
    %774 = vmatpush.msra.mxu0 %v148
    %775 = vmatpush.msra.mxu0 %v147
    %776 = vmatpush.msra.mxu0 %v146
    %777 = vmatpush.msra.mxu0 %v145
    %778 = vmatmul.f32.gmra.mxu0 %v702
    %v779 = vpop.f32.mrf.mxu0
    %v780 = vadd.f32 0.0, %v779
    %781 = vdwg.mxu0
    %v783 = vrot.slane %v780, 4
    %v785 = vadd.f32 %v143, %v783
    %v786 = vxor.u32 %v785, 2147483648
    %v787 = vmul.f32 %v786, 1.442695
    %v788 = vpow.pop %v787
    %v789 = vadd.f32 %v788, 1.0
    %v790 = vrcp.pop %v789
    %v791 = vmul.f32 %v789, %v790
    %v792 = vsub.f32 1.0, %v791
    %v793 = vmul.f32 %v790, %v792
    %v794 = vadd.f32 %v790, %v793
    %vm795 = vweird.f32 %v789
    %vm796 = vweird.f32 %v790
    %vm797 = vmor %vm795, %vm796
    %v798 = vsel %vm797, %v790, %v794
    %v799 = vand.u32 2147483647, %v789
    %vm800 = vcmp.eq.f32.partialorder %v799, 8.507059e+37
    %v801 = vand.u32 %v789, 2147483648
    %v802 = vor.u32 1.1754944e-38, %v801
    %v803 = vsel %vm800, %v802, %v798
    %v804 = vmul.f32 1.0, %v803
    %v805 = vtanh.pop %v785
    %v807 = vrot.slane %v666, 7
    %v809 = vmul.f32 %v804, %v807
    %811 = vrot.lane.b32.xlu0 %v805, 64
    %v812 = vpop.permute.xlu0 %811
    %v814 = vmul.f32 %v804, %v812
    %816 = vrot.lane.b32.xlu0 %v814, 32
    %v817 = vpop.permute.xlu0 %816
    %v819 = vadd.f32 %v809, %v817
    %v820 = vtanh.pop %v819
    %822 = vrot.lane.b32.xlu0 %v820, 64
    %v823 = vpop.permute.xlu0 %822
    %v825 = vmul.f32 %v804, %v823
    %827 = vrot.lane.b32.xlu0 %v761, 32
    %v828 = vpop.permute.xlu0 %827
    %v829 = vsel %vm158, %v828, 0
    %831 = vmatpush.msra.mxu0 0.0
    %832 = vmatpush.msra.mxu0 0.0
    %833 = vmatpush.msra.mxu0 0.0
    %834 = vmatpush.msra.mxu0 0.0
    %835 = vmatpush.msra.mxu0 0.0
    %836 = vmatpush.msra.mxu0 0.0
    %837 = vmatpush.msra.mxu0 0.0
    %838 = vmatpush.msra.mxu0 0.0
    %839 = vmatpush.msra.mxu0 0.0
    %840 = vmatpush.msra.mxu0 0.0
    %841 = vmatpush.msra.mxu0 0.0
    %842 = vmatpush.msra.mxu0 0.0
    %843 = vmatpush.msra.mxu0 %v156
    %844 = vmatpush.msra.mxu0 %v155
    %845 = vmatpush.msra.mxu0 %v154
    %846 = vmatpush.msra.mxu0 %v153
    %847 = vmatmul.f32.gmra.mxu0 %v829
    %v848 = vpop.f32.mrf.mxu0
    %v849 = vadd.f32 0.0, %v848
    %850 = vdwg.mxu0
    %v852 = vrot.slane %v825, 4
    %853 = vrot.lane.b32.xlu0 %v852, 32
    %v854 = vpop.permute.xlu0 %853
    %v855 = vsel %vm158, %v854, 0
    %857 = vmatpush.msra.mxu0 0.0
    %858 = vmatpush.msra.mxu0 0.0
    %859 = vmatpush.msra.mxu0 0.0
    %860 = vmatpush.msra.mxu0 0.0
    %861 = vmatpush.msra.mxu0 0.0
    %862 = vmatpush.msra.mxu0 0.0
    %863 = vmatpush.msra.mxu0 0.0
    %864 = vmatpush.msra.mxu0 0.0
    %865 = vmatpush.msra.mxu0 0.0
    %866 = vmatpush.msra.mxu0 0.0
    %867 = vmatpush.msra.mxu0 0.0
    %868 = vmatpush.msra.mxu0 0.0
    %869 = vmatpush.msra.mxu0 %v152
    %870 = vmatpush.msra.mxu0 %v151
    %871 = vmatpush.msra.mxu0 %v150
    %872 = vmatpush.msra.mxu0 %v149
    %873 = vmatmul.f32.gmra.mxu0 %v855
    %v874 = vpop.f32.mrf.mxu0
    %v875 = vadd.f32 %v849, %v874
    %876 = vdwg.mxu0
    %v877 = vadd.f32 %v875, %v157
    %v878 = vxor.u32 %v877, 2147483648
    %v879 = vmul.f32 %v878, 1.442695
    %v880 = vpow.pop %v879
    %v881 = vadd.f32 %v880, 1.0
    %v882 = vrcp.pop %v881
    %v883 = vmul.f32 %v881, %v882
    %v884 = vsub.f32 1.0, %v883
    %v885 = vmul.f32 %v882, %v884
    %v886 = vadd.f32 %v882, %v885
    %vm887 = vweird.f32 %v881
    %vm888 = vweird.f32 %v882
    %vm889 = vmor %vm887, %vm888
    %v890 = vsel %vm889, %v882, %v886
    %v891 = vand.u32 2147483647, %v881
    %vm892 = vcmp.eq.f32.partialorder %v891, 8.507059e+37
    %v893 = vand.u32 %v881, 2147483648
    %v894 = vor.u32 1.1754944e-38, %v893
    %v895 = vsel %vm892, %v894, %v890
    %v896 = vmul.f32 1.0, %v895
    %v897 = vtanh.pop %v877
    %v898 = vmul.f32 %v896, %v755
    %900 = vrot.lane.b32.xlu0 %v897, 64
    %v901 = vpop.permute.xlu0 %900
    %v903 = vmul.f32 %v896, %v901
    %905 = vrot.lane.b32.xlu0 %v903, 32
    %v906 = vpop.permute.xlu0 %905
    %v908 = vadd.f32 %v898, %v906
    %v909 = vtanh.pop %v908
    %911 = vrot.lane.b32.xlu0 %v909, 64
    %v912 = vpop.permute.xlu0 %911
    %v914 = vmul.f32 %v896, %v912
    %915 = vmatpush.msra.mxu0 0.0
    %916 = vmatpush.msra.mxu0 0.0
    %917 = vmatpush.msra.mxu0 0.0
    %918 = vmatpush.msra.mxu0 0.0
    %919 = vmatpush.msra.mxu0 0.0
    %920 = vmatpush.msra.mxu0 0.0
    %921 = vmatpush.msra.mxu0 0.0
    %922 = vmatpush.msra.mxu0 0.0
    %923 = vmatpush.msra.mxu0 0.0
    %924 = vmatpush.msra.mxu0 0.0
    %925 = vmatpush.msra.mxu0 0.0
    %926 = vmatpush.msra.mxu0 0.0
    %927 = vmatpush.msra.mxu0 %v148
    %928 = vmatpush.msra.mxu0 %v147
    %929 = vmatpush.msra.mxu0 %v146
    %930 = vmatpush.msra.mxu0 %v145
    %931 = vmatmul.f32.gmra.mxu0 %v855
    %v932 = vpop.f32.mrf.mxu0
    %v933 = vadd.f32 0.0, %v932
    %934 = vdwg.mxu0
    %v936 = vrot.slane %v933, 3
    %v938 = vadd.f32 %v143, %v936
    %v939 = vxor.u32 %v938, 2147483648
    %v940 = vmul.f32 %v939, 1.442695
    %v941 = vpow.pop %v940
    %v942 = vadd.f32 %v941, 1.0
    %v943 = vrcp.pop %v942
    %v944 = vmul.f32 %v942, %v943
    %v945 = vsub.f32 1.0, %v944
    %v946 = vmul.f32 %v943, %v945
    %v947 = vadd.f32 %v943, %v946
    %vm948 = vweird.f32 %v942
    %vm949 = vweird.f32 %v943
    %vm950 = vmor %vm948, %vm949
    %v951 = vsel %vm950, %v943, %v947
    %v952 = vand.u32 2147483647, %v942
    %vm953 = vcmp.eq.f32.partialorder %v952, 8.507059e+37
    %v954 = vand.u32 %v942, 2147483648
    %v955 = vor.u32 1.1754944e-38, %v954
    %v956 = vsel %vm953, %v955, %v951
    %v957 = vmul.f32 1.0, %v956
    %v958 = vtanh.pop %v938
    %v960 = vrot.slane %v819, 7
    %v962 = vmul.f32 %v957, %v960
    %964 = vrot.lane.b32.xlu0 %v958, 64
    %v965 = vpop.permute.xlu0 %964
    %v967 = vmul.f32 %v957, %v965
    %969 = vrot.lane.b32.xlu0 %v967, 32
    %v970 = vpop.permute.xlu0 %969
    %v972 = vadd.f32 %v962, %v970
    %v973 = vtanh.pop %v972
    %975 = vrot.lane.b32.xlu0 %v973, 64
    %v976 = vpop.permute.xlu0 %975
    %v978 = vmul.f32 %v957, %v976
    %980 = vrot.lane.b32.xlu0 %v914, 32
    %v981 = vpop.permute.xlu0 %980
    %v982 = vsel %vm158, %v981, 0
    %984 = vmatpush.msra.mxu0 0.0
    %985 = vmatpush.msra.mxu0 0.0
    %986 = vmatpush.msra.mxu0 0.0
    %987 = vmatpush.msra.mxu0 0.0
    %988 = vmatpush.msra.mxu0 0.0
    %989 = vmatpush.msra.mxu0 0.0
    %990 = vmatpush.msra.mxu0 0.0
    %991 = vmatpush.msra.mxu0 0.0
    %992 = vmatpush.msra.mxu0 0.0
    %993 = vmatpush.msra.mxu0 0.0
    %994 = vmatpush.msra.mxu0 0.0
    %995 = vmatpush.msra.mxu0 0.0
    %996 = vmatpush.msra.mxu0 %v156
    %997 = vmatpush.msra.mxu0 %v155
    %998 = vmatpush.msra.mxu0 %v154
    %999 = vmatpush.msra.mxu0 %v153
    %1000 = vmatmul.f32.gmra.mxu0 %v982
    %v1001 = vpop.f32.mrf.mxu0
    %v1002 = vadd.f32 0.0, %v1001
    %1003 = vdwg.mxu0
    %v1005 = vrot.slane %v978, 5
    %1006 = vrot.lane.b32.xlu0 %v1005, 32
    %v1007 = vpop.permute.xlu0 %1006
    %v1008 = vsel %vm158, %v1007, 0
    %1010 = vmatpush.msra.mxu0 0.0
    %1011 = vmatpush.msra.mxu0 0.0
    %1012 = vmatpush.msra.mxu0 0.0
    %1013 = vmatpush.msra.mxu0 0.0
    %1014 = vmatpush.msra.mxu0 0.0
    %1015 = vmatpush.msra.mxu0 0.0
    %1016 = vmatpush.msra.mxu0 0.0
    %1017 = vmatpush.msra.mxu0 0.0
    %1018 = vmatpush.msra.mxu0 0.0
    %1019 = vmatpush.msra.mxu0 0.0
    %1020 = vmatpush.msra.mxu0 0.0
    %1021 = vmatpush.msra.mxu0 0.0
    %1022 = vmatpush.msra.mxu0 %v152
    %1023 = vmatpush.msra.mxu0 %v151
    %1024 = vmatpush.msra.mxu0 %v150
    %1025 = vmatpush.msra.mxu0 %v149
    %1026 = vmatmul.f32.gmra.mxu0 %v1008
    %v1027 = vpop.f32.mrf.mxu0
    %v1028 = vadd.f32 %v1002, %v1027
    %1029 = vdwg.mxu0
    %v1030 = vadd.f32 %v1028, %v157
    %v1031 = vxor.u32 %v1030, 2147483648
    %v1032 = vmul.f32 %v1031, 1.442695
    %v1033 = vpow.pop %v1032
    %v1034 = vadd.f32 %v1033, 1.0
    %v1035 = vrcp.pop %v1034
    %v1036 = vmul.f32 %v1034, %v1035
    %v1037 = vsub.f32 1.0, %v1036
    %v1038 = vmul.f32 %v1035, %v1037
    %v1039 = vadd.f32 %v1035, %v1038
    %vm1040 = vweird.f32 %v1034
    %vm1041 = vweird.f32 %v1035
    %vm1042 = vmor %vm1040, %vm1041
    %v1043 = vsel %vm1042, %v1035, %v1039
    %v1044 = vand.u32 2147483647, %v1034
    %vm1045 = vcmp.eq.f32.partialorder %v1044, 8.507059e+37
    %v1046 = vand.u32 %v1034, 2147483648
    %v1047 = vor.u32 1.1754944e-38, %v1046
    %v1048 = vsel %vm1045, %v1047, %v1043
    %v1049 = vmul.f32 1.0, %v1048
    %v1050 = vtanh.pop %v1030
    %v1051 = vmul.f32 %v1049, %v908
    %1053 = vrot.lane.b32.xlu0 %v1050, 64
    %v1054 = vpop.permute.xlu0 %1053
    %v1056 = vmul.f32 %v1049, %v1054
    %1058 = vrot.lane.b32.xlu0 %v1056, 32
    %v1059 = vpop.permute.xlu0 %1058
    %v1061 = vadd.f32 %v1051, %v1059
    %v1062 = vtanh.pop %v1061
    %1064 = vrot.lane.b32.xlu0 %v1062, 64
    %v1065 = vpop.permute.xlu0 %1064
    %v1067 = vmul.f32 %v1049, %v1065
    %1068 = vmatpush.msra.mxu0 0.0
    %1069 = vmatpush.msra.mxu0 0.0
    %1070 = vmatpush.msra.mxu0 0.0
    %1071 = vmatpush.msra.mxu0 0.0
    %1072 = vmatpush.msra.mxu0 0.0
    %1073 = vmatpush.msra.mxu0 0.0
    %1074 = vmatpush.msra.mxu0 0.0
    %1075 = vmatpush.msra.mxu0 0.0
    %1076 = vmatpush.msra.mxu0 0.0
    %1077 = vmatpush.msra.mxu0 0.0
    %1078 = vmatpush.msra.mxu0 0.0
    %1079 = vmatpush.msra.mxu0 0.0
    %1080 = vmatpush.msra.mxu0 %v148
    %1081 = vmatpush.msra.mxu0 %v147
    %1082 = vmatpush.msra.mxu0 %v146
    %1083 = vmatpush.msra.mxu0 %v145
    %1084 = vmatmul.f32.gmra.mxu0 %v1008
    %v1085 = vpop.f32.mrf.mxu0
    %v1086 = vadd.f32 0.0, %v1085
    %1087 = vdwg.mxu0
    %v1089 = vrot.slane %v1086, 2
    %v1091 = vadd.f32 %v143, %v1089
    %v1092 = vxor.u32 %v1091, 2147483648
    %v1093 = vmul.f32 %v1092, 1.442695
    %v1094 = vpow.pop %v1093
    %v1095 = vadd.f32 %v1094, 1.0
    %v1096 = vrcp.pop %v1095
    %v1097 = vmul.f32 %v1095, %v1096
    %v1098 = vsub.f32 1.0, %v1097
    %v1099 = vmul.f32 %v1096, %v1098
    %v1100 = vadd.f32 %v1096, %v1099
    %vm1101 = vweird.f32 %v1095
    %vm1102 = vweird.f32 %v1096
    %vm1103 = vmor %vm1101, %vm1102
    %v1104 = vsel %vm1103, %v1096, %v1100
    %v1105 = vand.u32 2147483647, %v1095
    %vm1106 = vcmp.eq.f32.partialorder %v1105, 8.507059e+37
    %v1107 = vand.u32 %v1095, 2147483648
    %v1108 = vor.u32 1.1754944e-38, %v1107
    %v1109 = vsel %vm1106, %v1108, %v1104
    %v1110 = vmul.f32 1.0, %v1109
    %v1111 = vtanh.pop %v1091
    %v1113 = vrot.slane %v972, 7
    %v1115 = vmul.f32 %v1110, %v1113
    %1117 = vrot.lane.b32.xlu0 %v1111, 64
    %v1118 = vpop.permute.xlu0 %1117
    %v1120 = vmul.f32 %v1110, %v1118
    %1122 = vrot.lane.b32.xlu0 %v1120, 32
    %v1123 = vpop.permute.xlu0 %1122
    %v1125 = vadd.f32 %v1115, %v1123
    %v1126 = vtanh.pop %v1125
    %1128 = vrot.lane.b32.xlu0 %v1126, 64
    %v1129 = vpop.permute.xlu0 %1128
    %v1131 = vmul.f32 %v1110, %v1129
    %1133 = vrot.lane.b32.xlu0 %v1067, 32
    %v1134 = vpop.permute.xlu0 %1133
    %v1135 = vsel %vm158, %v1134, 0
    %1137 = vmatpush.msra.mxu0 0.0
    %1138 = vmatpush.msra.mxu0 0.0
    %1139 = vmatpush.msra.mxu0 0.0
    %1140 = vmatpush.msra.mxu0 0.0
    %1141 = vmatpush.msra.mxu0 0.0
    %1142 = vmatpush.msra.mxu0 0.0
    %1143 = vmatpush.msra.mxu0 0.0
    %1144 = vmatpush.msra.mxu0 0.0
    %1145 = vmatpush.msra.mxu0 0.0
    %1146 = vmatpush.msra.mxu0 0.0
    %1147 = vmatpush.msra.mxu0 0.0
    %1148 = vmatpush.msra.mxu0 0.0
    %1149 = vmatpush.msra.mxu0 %v156
    %1150 = vmatpush.msra.mxu0 %v155
    %1151 = vmatpush.msra.mxu0 %v154
    %1152 = vmatpush.msra.mxu0 %v153
    %1153 = vmatmul.f32.gmra.mxu0 %v1135
    %v1154 = vpop.f32.mrf.mxu0
    %v1155 = vadd.f32 0.0, %v1154
    %1156 = vdwg.mxu0
    %v1158 = vrot.slane %v1131, 6
    %1159 = vrot.lane.b32.xlu0 %v1158, 32
    %v1160 = vpop.permute.xlu0 %1159
    %v1161 = vsel %vm158, %v1160, 0
    %1163 = vmatpush.msra.mxu0 0.0
    %1164 = vmatpush.msra.mxu0 0.0
    %1165 = vmatpush.msra.mxu0 0.0
    %1166 = vmatpush.msra.mxu0 0.0
    %1167 = vmatpush.msra.mxu0 0.0
    %1168 = vmatpush.msra.mxu0 0.0
    %1169 = vmatpush.msra.mxu0 0.0
    %1170 = vmatpush.msra.mxu0 0.0
    %1171 = vmatpush.msra.mxu0 0.0
    %1172 = vmatpush.msra.mxu0 0.0
    %1173 = vmatpush.msra.mxu0 0.0
    %1174 = vmatpush.msra.mxu0 0.0
    %1175 = vmatpush.msra.mxu0 %v152
    %1176 = vmatpush.msra.mxu0 %v151
    %1177 = vmatpush.msra.mxu0 %v150
    %1178 = vmatpush.msra.mxu0 %v149
    %1179 = vmatmul.f32.gmra.mxu0 %v1161
    %v1180 = vpop.f32.mrf.mxu0
    %v1181 = vadd.f32 %v1155, %v1180
    %1182 = vdwg.mxu0
    %v1183 = vadd.f32 %v1181, %v157
    %v1184 = vxor.u32 %v1183, 2147483648
    %v1185 = vmul.f32 %v1184, 1.442695
    %v1186 = vpow.pop %v1185
    %v1187 = vadd.f32 %v1186, 1.0
    %v1188 = vrcp.pop %v1187
    %v1189 = vmul.f32 %v1187, %v1188
    %v1190 = vsub.f32 1.0, %v1189
    %v1191 = vmul.f32 %v1188, %v1190
    %v1192 = vadd.f32 %v1188, %v1191
    %vm1193 = vweird.f32 %v1187
    %vm1194 = vweird.f32 %v1188
    %vm1195 = vmor %vm1193, %vm1194
    %v1196 = vsel %vm1195, %v1188, %v1192
    %v1197 = vand.u32 2147483647, %v1187
    %vm1198 = vcmp.eq.f32.partialorder %v1197, 8.507059e+37
    %v1199 = vand.u32 %v1187, 2147483648
    %v1200 = vor.u32 1.1754944e-38, %v1199
    %v1201 = vsel %vm1198, %v1200, %v1196
    %v1202 = vmul.f32 1.0, %v1201
    %v1203 = vtanh.pop %v1183
    %v1204 = vmul.f32 %v1202, %v1061
    %1206 = vrot.lane.b32.xlu0 %v1203, 64
    %v1207 = vpop.permute.xlu0 %1206
    %v1209 = vmul.f32 %v1202, %v1207
    %1211 = vrot.lane.b32.xlu0 %v1209, 32
    %v1212 = vpop.permute.xlu0 %1211
    %v1214 = vadd.f32 %v1204, %v1212
    %v1215 = vtanh.pop %v1214
    %1217 = vrot.lane.b32.xlu0 %v1215, 64
    %v1218 = vpop.permute.xlu0 %1217
    %v1220 = vmul.f32 %v1202, %v1218
    %1221 = vmatpush.msra.mxu0 0.0
    %1222 = vmatpush.msra.mxu0 0.0
    %1223 = vmatpush.msra.mxu0 0.0
    %1224 = vmatpush.msra.mxu0 0.0
    %1225 = vmatpush.msra.mxu0 0.0
    %1226 = vmatpush.msra.mxu0 0.0
    %1227 = vmatpush.msra.mxu0 0.0
    %1228 = vmatpush.msra.mxu0 0.0
    %1229 = vmatpush.msra.mxu0 0.0
    %1230 = vmatpush.msra.mxu0 0.0
    %1231 = vmatpush.msra.mxu0 0.0
    %1232 = vmatpush.msra.mxu0 0.0
    %1233 = vmatpush.msra.mxu0 %v148
    %1234 = vmatpush.msra.mxu0 %v147
    %1235 = vmatpush.msra.mxu0 %v146
    %1236 = vmatpush.msra.mxu0 %v145
    %1237 = vmatmul.f32.gmra.mxu0 %v1161
    %v1238 = vpop.f32.mrf.mxu0
    %v1239 = vadd.f32 0.0, %v1238
    %1240 = vdwg.mxu0
    %v1242 = vrot.slane %v1239, 1
    %v1244 = vadd.f32 %v143, %v1242
    %v1245 = vxor.u32 %v1244, 2147483648
    %v1246 = vmul.f32 %v1245, 1.442695
    %v1247 = vpow.pop %v1246
    %v1248 = vadd.f32 %v1247, 1.0
    %v1249 = vrcp.pop %v1248
    %v1250 = vmul.f32 %v1248, %v1249
    %v1251 = vsub.f32 1.0, %v1250
    %v1252 = vmul.f32 %v1249, %v1251
    %v1253 = vadd.f32 %v1249, %v1252
    %vm1254 = vweird.f32 %v1248
    %vm1255 = vweird.f32 %v1249
    %vm1256 = vmor %vm1254, %vm1255
    %v1257 = vsel %vm1256, %v1249, %v1253
    %v1258 = vand.u32 2147483647, %v1248
    %vm1259 = vcmp.eq.f32.partialorder %v1258, 8.507059e+37
    %v1260 = vand.u32 %v1248, 2147483648
    %v1261 = vor.u32 1.1754944e-38, %v1260
    %v1262 = vsel %vm1259, %v1261, %v1257
    %v1263 = vmul.f32 1.0, %v1262
    %v1264 = vtanh.pop %v1244
    %v1266 = vrot.slane %v1125, 7
    %v1268 = vmul.f32 %v1263, %v1266
    %1270 = vrot.lane.b32.xlu0 %v1264, 64
    %v1271 = vpop.permute.xlu0 %1270
    %v1273 = vmul.f32 %v1263, %v1271
    %1275 = vrot.lane.b32.xlu0 %v1273, 32
    %v1276 = vpop.permute.xlu0 %1275
    %v1278 = vadd.f32 %v1268, %v1276
    %v1279 = vtanh.pop %v1278
    %1281 = vrot.lane.b32.xlu0 %v1279, 64
    %v1282 = vpop.permute.xlu0 %1281
    %v1284 = vmul.f32 %v1263, %v1282
    %1286 = vrot.lane.b32.xlu0 %v1220, 32
    %v1287 = vpop.permute.xlu0 %1286
    %v1288 = vsel %vm158, %v1287, 0
    %1290 = vmatpush.msra.mxu0 0.0
    %1291 = vmatpush.msra.mxu0 0.0
    %1292 = vmatpush.msra.mxu0 0.0
    %1293 = vmatpush.msra.mxu0 0.0
    %1294 = vmatpush.msra.mxu0 0.0
    %1295 = vmatpush.msra.mxu0 0.0
    %1296 = vmatpush.msra.mxu0 0.0
    %1297 = vmatpush.msra.mxu0 0.0
    %1298 = vmatpush.msra.mxu0 0.0
    %1299 = vmatpush.msra.mxu0 0.0
    %1300 = vmatpush.msra.mxu0 0.0
    %1301 = vmatpush.msra.mxu0 0.0
    %1302 = vmatpush.msra.mxu0 %v156
    %1303 = vmatpush.msra.mxu0 %v155
    %1304 = vmatpush.msra.mxu0 %v154
    %1305 = vmatpush.msra.mxu0 %v153
    %1306 = vmatmul.f32.gmra.mxu0 %v1288
    %v1307 = vpop.f32.mrf.mxu0
    %v1308 = vadd.f32 0.0, %v1307
    %1309 = vdwg.mxu0
    %v1311 = vrot.slane %v1284, 7
    %1312 = vrot.lane.b32.xlu0 %v1311, 32
    %v1313 = vpop.permute.xlu0 %1312
    %v1314 = vsel %vm158, %v1313, 0
    %1316 = vmatpush.msra.mxu0 0.0
    %1317 = vmatpush.msra.mxu0 0.0
    %1318 = vmatpush.msra.mxu0 0.0
    %1319 = vmatpush.msra.mxu0 0.0
    %1320 = vmatpush.msra.mxu0 0.0
    %1321 = vmatpush.msra.mxu0 0.0
    %1322 = vmatpush.msra.mxu0 0.0
    %1323 = vmatpush.msra.mxu0 0.0
    %1324 = vmatpush.msra.mxu0 0.0
    %1325 = vmatpush.msra.mxu0 0.0
    %1326 = vmatpush.msra.mxu0 0.0
    %1327 = vmatpush.msra.mxu0 0.0
    %1328 = vmatpush.msra.mxu0 %v152
    %1329 = vmatpush.msra.mxu0 %v151
    %1330 = vmatpush.msra.mxu0 %v150
    %1331 = vmatpush.msra.mxu0 %v149
    %1332 = vmatmul.f32.gmra.mxu0 %v1314
    %v1333 = vpop.f32.mrf.mxu0
    %v1334 = vadd.f32 %v1308, %v1333
    %1335 = vdwg.mxu0
    %v1336 = vadd.f32 %v1334, %v157
    %v1337 = vxor.u32 %v1336, 2147483648
    %v1338 = vmul.f32 %v1337, 1.442695
    %v1339 = vpow.pop %v1338
    %v1340 = vadd.f32 %v1339, 1.0
    %v1341 = vrcp.pop %v1340
    %v1342 = vmul.f32 %v1340, %v1341
    %v1343 = vsub.f32 1.0, %v1342
    %v1344 = vmul.f32 %v1341, %v1343
    %v1345 = vadd.f32 %v1341, %v1344
    %vm1346 = vweird.f32 %v1340
    %vm1347 = vweird.f32 %v1341
    %vm1348 = vmor %vm1346, %vm1347
    %v1349 = vsel %vm1348, %v1341, %v1345
    %v1350 = vand.u32 2147483647, %v1340
    %vm1351 = vcmp.eq.f32.partialorder %v1350, 8.507059e+37
    %v1352 = vand.u32 %v1340, 2147483648
    %v1353 = vor.u32 1.1754944e-38, %v1352
    %v1354 = vsel %vm1351, %v1353, %v1349
    %v1355 = vmul.f32 1.0, %v1354
    %v1356 = vtanh.pop %v1336
    %v1357 = vmul.f32 %v1355, %v1214
    %1359 = vrot.lane.b32.xlu0 %v1356, 64
    %v1360 = vpop.permute.xlu0 %1359
    %v1362 = vmul.f32 %v1355, %v1360
    %1364 = vrot.lane.b32.xlu0 %v1362, 32
    %v1365 = vpop.permute.xlu0 %1364
    %v1367 = vadd.f32 %v1357, %v1365
    %v1368 = vtanh.pop %v1367
    %1370 = vrot.lane.b32.xlu0 %v1368, 64
    %v1371 = vpop.permute.xlu0 %1370
    %v1373 = vmul.f32 %v1355, %v1371
    %v1374 = vrot.slane %v455, 7
    %v1376 = vrot.slane %v608, 6
    %v1378 = vrot.slane %v761, 5
    %v1380 = vrot.slane %v914, 4
    %v1382 = vrot.slane %v1067, 3
    %v1384 = vrot.slane %v1220, 2
    %v1387 = vrot.slane %v1373, 1
    %vm1389 = vcmask 1040384
    %v1390 = vsel %vm1389, %v302, %v1374
    %vm1391 = vcmask 1041408
    %v1392 = vsel %vm1391, %v1390, %v1376
    %vm1393 = vcmask 1042432
    %v1394 = vsel %vm1393, %v1392, %v1378
    %vm1395 = vcmask 1043456
    %v1396 = vsel %vm1395, %v1394, %v1380
    %vm1397 = vcmask 1044480
    %v1398 = vsel %vm1397, %v1396, %v1382
    %vm1399 = vcmask 1045504
    %v1400 = vsel %vm1399, %v1398, %v1384
    %vm1401 = vcmask 1046528
    %v1402 = vsel %vm1401, %v1400, %v1387
    %v1403 = vld [vmem:[#allocation9] sm:$0xff]
    %v1404 = vld [vmem:[#allocation9 + $0x8] sm:$0xff]
    %v1405 = vld [vmem:[#allocation9 + $0x10] sm:$0xff]
    %v1406 = vld [vmem:[#allocation9 + $0x18] sm:$0xff]
    %v1407 = vld [vmem:[%s8] sm:$0x1]
    %v1409 = vperm.slane %v1407, 0
    %1412 = vrot.lane.b32.xlu0 %v1402, 32
    %v1413 = vpop.permute.xlu0 %1412
    %v1414 = vsel %vm158, %v1413, 0
    %1416 = vmatpush.msra.mxu0 0.0
    %1417 = vmatpush.msra.mxu0 0.0
    %1418 = vmatpush.msra.mxu0 0.0
    %1419 = vmatpush.msra.mxu0 0.0
    %1420 = vmatpush.msra.mxu0 0.0
    %1421 = vmatpush.msra.mxu0 0.0
    %1422 = vmatpush.msra.mxu0 0.0
    %1423 = vmatpush.msra.mxu0 0.0
    %1424 = vmatpush.msra.mxu0 0.0
    %1425 = vmatpush.msra.mxu0 0.0
    %1426 = vmatpush.msra.mxu0 0.0
    %1427 = vmatpush.msra.mxu0 0.0
    %1428 = vmatpush.msra.mxu0 %v1406
    %1429 = vmatpush.msra.mxu0 %v1405
    %1430 = vmatpush.msra.mxu0 %v1404
    %1431 = vmatpush.msra.mxu0 %v1403
    %1432 = vmatmul.f32.gmra.mxu0 %v1414
    %v1433 = vpop.f32.mrf.mxu0
    %v1434 = vadd.f32 %v1409, %v1433
    %1435 = vdwg.mxu0
    %v1436 = vtanh.pop %v1434
    %v1437 = vld [vmem:[%s9] sm:$0xff]
    %v1438 = vld [vmem:[%s9 + $0x8] sm:$0xff]
    %v1439 = vld [vmem:[%s9 + $0x10] sm:$0xff]
    %v1440 = vld [vmem:[%s9 + $0x18] sm:$0x3]
    %v1441 = vld [vmem:[%s10] sm:$0x1]
    %v1443 = vperm.slane %v1441, 0
    %vm1445 = vcmask 211968
    %v1447 = vsel %vm1445, %v1436, 0
    %v1450 = vsel %vm1391, %v1440, 0
    %1452 = vmatpush.msra.mxu0 0.0
    %1453 = vmatpush.msra.mxu0 0.0
    %1454 = vmatpush.msra.mxu0 0.0
    %1455 = vmatpush.msra.mxu0 0.0
    %1456 = vmatpush.msra.mxu0 0.0
    %1457 = vmatpush.msra.mxu0 0.0
    %1458 = vmatpush.msra.mxu0 0.0
    %1459 = vmatpush.msra.mxu0 0.0
    %1460 = vmatpush.msra.mxu0 0.0
    %1461 = vmatpush.msra.mxu0 0.0
    %1462 = vmatpush.msra.mxu0 0.0
    %1463 = vmatpush.msra.mxu0 0.0
    %1464 = vmatpush.msra.mxu0 %v1450
    %1465 = vmatpush.msra.mxu0 %v1439
    %1466 = vmatpush.msra.mxu0 %v1438
    %1467 = vmatpush.msra.mxu0 %v1437
    %1468 = vmatmul.f32.gmra.mxu0 %v1447
    %v1469 = vpop.f32.mrf.mxu0
    %v1470 = vadd.f32 %v1443, %v1469
    %1471 = vdwg.mxu0
    %vm1472 = vcmask 15360
    %v1473 = vsel %vm1472, %v1470, -inf
    %1474 = vmax.xlane.f32.xlu0 %v1473
    %v1475 = vpop.xlane.xlu0 %1474
    %v1476 = vsub.f32 %v1470, %v1475
    %v1477 = vmul.f32 %v1476, 1.442695
    %v1478 = vpow.pop %v1477
    %v1479 = vsel %vm1472, %v1478, 0.0
    %1480 = vadd.xlane.f32.xlu0 %v1479
    %v1481 = vpop.xlane.xlu0 %1480
    %v1482 = vrcp.pop %v1481
    %v1483 = vmul.f32 %v1481, %v1482
    %v1484 = vsub.f32 1.0, %v1483
    %v1485 = vmul.f32 %v1482, %v1484
    %v1486 = vadd.f32 %v1482, %v1485
    %vm1487 = vweird.f32 %v1481
    %vm1488 = vweird.f32 %v1482
    %vm1489 = vmor %vm1487, %vm1488
    %v1490 = vsel %vm1489, %v1482, %v1486
    %v1491 = vand.u32 2147483647, %v1481
    %vm1492 = vcmp.eq.f32.partialorder %v1491, 8.507059e+37
    %v1493 = vand.u32 %v1481, 2147483648
    %v1494 = vor.u32 1.1754944e-38, %v1493
    %v1495 = vsel %vm1492, %v1494, %v1490
    %v1496 = vmul.f32 %v1478, %v1495
    %1497 = vst.msk [vmem:[%s11] sm:$0xff] %vm1472, %v1496
    // Predicated region
    $region66: #{tpu_custom_call.1} parent=1 // pred_check
      _
    $region67: #{tpu_custom_call.1} parent=1 // pred_check_branch
      %1499 = sbr.rel (0) target = $region69
    $region68: #{tpu_custom_call.1} parent=1 // pred_region
      _
    $region69: #{tpu_custom_call.1} parent=1 // pred_fallthru
      _
    // Predicated region
    $region70: #{tpu_custom_call.1} parent=1 // pred_check
      _
    $region71: #{tpu_custom_call.1} parent=1 // pred_check_branch
      %1501 = sbr.rel (0) target = $region73
    $region72: #{tpu_custom_call.1} parent=1 // pred_region
      _
    $region73: #{tpu_custom_call.1} parent=1 // pred_fallthru
      _
    %1502 = vsyncpa [#allocation3], 1
    %1503 = vsyncpa [#allocation5], 1
    %1504 = vsyncpa [#allocation8], 1

</llo_original>
